<compile_context>
chip_gen: v6e
topology: v6e:2x2x1
jax: 0.10.0
libtpu: 0.0.40
codegen_flags: <defaults>
</compile_context>

<pallas_src>
import jax
import jax.numpy as jnp
from jax.experimental import pallas as pl
from jax.experimental.pallas import tpu as pltpu


def _round_up(a, b):
    return ((a + b - 1) // b) * b


def _silu(v):
    # x * sigmoid(x) with sigmoid(x) = 0.5 + 0.5*tanh(0.5*x): one EUP op per
    # element and numerically safe for large |x| (no exp overflow path).
    return v * (0.5 + 0.5 * jnp.tanh(0.5 * v))


def fused_silu_conv1x1_kernel(x_ref, w1_ref, b1_ref, w2_ref, b2_ref,
                              w3_ref, b3_ref, o_ref):
    # x_ref : (1,  TL) bf16  pixel tile, pixels on the lane axis
    # w1_ref: (C1, 1)  bf16  W1^T column
    # b1_ref: (C1, 1)  bf16
    # w2_ref: (C2, C1) bf16  W2^T
    # b2_ref: (C2, 1)  f32
    # w3_ref: (C3, C2) f32   W3^T
    # b3_ref: (C3, 1)  f32
    # o_ref : (C3, TL) f32   lane-dense output tile
    x = x_ref[...]                                            # (1, TL) bf16

    # ---- stage 1: 1 -> 216 as a bf16 VPU broadcast FMA + bf16 SiLU -------
    v1 = w1_ref[...] * x + b1_ref[...]                        # (216, TL) bf16
    h1 = _silu(v1)                                            # (216, TL) bf16

    # ---- stage 2: 216 -> 9 on the MXU (bf16 in, f32 accumulate) + SiLU ---
    v2 = jnp.dot(w2_ref[...], h1,
                 preferred_element_type=jnp.float32)          # (9, TL) f32
    v2 = v2 + b2_ref[...]
    h2 = _silu(v2)                                            # (9, TL) f32

    # ---- stage 3: 9 -> 3 as a tiny MXU matmul + SiLU, single block store -
    v3 = jnp.dot(w3_ref[...], h2,
                 preferred_element_type=jnp.float32)          # (3, TL) f32
    v3 = v3 + b3_ref[...]
    o_ref[...] = _silu(v3).astype(o_ref.dtype)


def model_forward(x_nchw, params, *, tl=8192):
    """x_nchw: (N, 1, H, W) float32.  Returns (N, 3, H, W) float32."""
    (w1t, b1v), (w2t, b2v), (w3t, b3v) = params   # weights stored as (C_out, C_in)
    N, cin, H, W = x_nchw.shape
    c1, c2, c3 = w1t.shape[0], w2t.shape[0], w3t.shape[0]     # 216, 9, 3
    assert cin == 1 and w1t.shape[1] == 1

    M = N * H * W
    # NCHW with C_in == 1 -> channels-first (1, M); pure reshape, no transpose.
    # Cast once to bf16: stage 1 runs natively in bf16 and the input DMA halves.
    x_cf = x_nchw.reshape(1, M).astype(jnp.bfloat16)

    # Lane-dense tiling; pad the pixel axis so any N*H*W is supported.
    tl_eff = min(tl, _round_up(M, 128))
    # Keep >= 2 grid steps when possible so the "parallel" pixel axis can be
    # sharded across both TensorCores on v7x (one giant tile would serialize).
    if M >= 2 * 128:
        tl_eff = min(tl_eff, _round_up((M + 1) // 2, 128))
    m_pad = _round_up(M, tl_eff)
    if m_pad != M:
        x_cf = jnp.pad(x_cf, ((0, 0), (0, m_pad - M)))

    out_cf = pl.pallas_call(
        fused_silu_conv1x1_kernel,
        out_shape=jax.ShapeDtypeStruct((c3, m_pad), jnp.float32),
        grid_spec=pltpu.PrefetchScalarGridSpec(
            num_scalar_prefetch=0,
            grid=(m_pad // tl_eff,),
            in_specs=[
                pl.BlockSpec((1, tl_eff), lambda i: (0, i)),    # x tile (bf16)
                pl.BlockSpec((c1, 1), lambda i: (0, 0)),        # W1^T column (bf16)
                pl.BlockSpec((c1, 1), lambda i: (0, 0)),        # b1 column (bf16)
                pl.BlockSpec((c2, c1), lambda i: (0, 0)),       # W2^T (bf16)
                pl.BlockSpec((c2, 1), lambda i: (0, 0)),        # b2 column (f32)
                pl.BlockSpec((c3, c2), lambda i: (0, 0)),       # W3^T (f32)
                pl.BlockSpec((c3, 1), lambda i: (0, 0)),        # b3 column (f32)
            ],
            out_specs=pl.BlockSpec((c3, tl_eff), lambda i: (0, i)),
        ),
        compiler_params=pltpu.CompilerParams(
            dimension_semantics=("parallel",),
            vmem_limit_bytes=32 * 1024 * 1024),
    )(x_cf,
      w1t.astype(jnp.bfloat16), b1v.reshape(c1, 1).astype(jnp.bfloat16),
      w2t.astype(jnp.bfloat16), b2v.reshape(c2, 1).astype(jnp.float32),
      w3t.astype(jnp.float32), b3v.reshape(c3, 1).astype(jnp.float32))

    out_cf = out_cf[:, :M]                                     # drop pixel padding
    # (3, N*H*W) -> (N, 3, H, W); no-op data movement for N == 1.
    return jnp.transpose(out_cf.reshape(c3, N, H, W), (1, 0, 2, 3))


def make_params(key):
    """Deterministic init mirroring ConvTranspose2d(.., 1x1) parameter shapes.

    PyTorch ConvTranspose2d weight has shape (C_in, C_out, 1, 1); we store its
    transpose (C_out, C_in) so the kernel computes W^T @ h directly.  Biases
    are stored as (C_out,).
    """
    dims = [(1, 216), (216, 9), (9, 3)]                        # (C_in, C_out)
    params = []
    for i, (c_in, c_out) in enumerate(dims):
        kw, kb = jax.random.split(jax.random.fold_in(key, i))
        bound = 1.0 / (c_in ** 0.5)
        wt = jax.random.uniform(kw, (c_out, c_in), jnp.float32, -bound, bound)
        b = jax.random.uniform(kb, (c_out,), jnp.float32, -bound, bound)
        params.append((wt, b))
    return params


def reference_forward(x_nchw, params):
    """Pure-JAX f32 reference (same math as the PyTorch module, no Pallas)."""
    N, _, H, W = x_nchw.shape
    h = x_nchw.reshape(1, N * H * W).astype(jnp.float32)
    for wt, b in params:
        v = wt @ h + b[:, None]
        h = v * jax.nn.sigmoid(v)
    c_out = h.shape[0]
    return jnp.transpose(h.reshape(c_out, N, H, W), (1, 0, 2, 3))


if __name__ == "__main__":
    key = jax.random.PRNGKey(0)
    kx, kp = jax.random.split(key)

    # Small shape consistent with the module (original is 1x1x512x512).
    x = jax.random.normal(kx, (1, 1, 64, 64), jnp.float32)
    params = make_params(kp)

    # tl=1024 -> 4 pixel tiles: exercises the multi-step pipelined grid.
    out = model_forward(x, params, tl=1024)
    out = jax.block_until_ready(out)

    ref = reference_forward(x, params)
    assert out.shape == (1, 3, 64, 64), out.shape
    # Stage-1 (inputs/weights/SiLU) and stage-2 operands run in bf16 with f32
    # accumulation, so compare against the pure-f32 reference with a
    # correspondingly loosened tolerance (still catches layout/weight bugs).
    max_err = float(jnp.max(jnp.abs(out - ref)))
    assert jnp.allclose(out, ref, atol=5e-2, rtol=5e-2), (
        f"mismatch vs reference, max abs err = {max_err}")

    print("KERNEL_OK")
</pallas_src>

<mosaic_0001>
module attributes {stable_mosaic.version = 11 : i64} {
  func.func @fused_silu_conv1x1_kernel(%arg0: i32, %arg1: memref<1x1024xbf16, #tpu.memory_space<vmem>>, %arg2: memref<216x1xbf16, #tpu.memory_space<vmem>>, %arg3: memref<216x1xbf16, #tpu.memory_space<vmem>>, %arg4: memref<9x216xbf16, #tpu.memory_space<vmem>>, %arg5: memref<9x1xf32, #tpu.memory_space<vmem>>, %arg6: memref<3x9xf32, #tpu.memory_space<vmem>>, %arg7: memref<3x1xf32, #tpu.memory_space<vmem>>, %arg8: memref<3x1024xf32, #tpu.memory_space<vmem>>) attributes {dimension_semantics = [#tpu.dimension_semantics<parallel>], iteration_bounds = array<i64: 4>, scalar_prefetch = 0 : i64, scratch_operands = 0 : i64, tpu.core_type = #tpu.core_type<tc>, window_params = [{transform_indices = @transform_0, window_bounds = array<i64: 1, 1024>}, {pipeline_mode = #tpu.pipeline_mode<synchronous>, transform_indices = @transform_1, window_bounds = array<i64: 216, 1>}, {pipeline_mode = #tpu.pipeline_mode<synchronous>, transform_indices = @transform_2, window_bounds = array<i64: 216, 1>}, {pipeline_mode = #tpu.pipeline_mode<synchronous>, transform_indices = @transform_3, window_bounds = array<i64: 9, 216>}, {pipeline_mode = #tpu.pipeline_mode<synchronous>, transform_indices = @transform_4, window_bounds = array<i64: 9, 1>}, {pipeline_mode = #tpu.pipeline_mode<synchronous>, transform_indices = @transform_5, window_bounds = array<i64: 3, 9>}, {pipeline_mode = #tpu.pipeline_mode<synchronous>, transform_indices = @transform_6, window_bounds = array<i64: 3, 1>}, {transform_indices = @transform_7, window_bounds = array<i64: 3, 1024>}]} {
    %c0 = arith.constant 0 : index
    %c0_0 = arith.constant 0 : index
    %0 = vector.load %arg1[%c0, %c0_0] : memref<1x1024xbf16, #tpu.memory_space<vmem>>, vector<1x1024xbf16>
    %c0_1 = arith.constant 0 : index
    %c0_2 = arith.constant 0 : index
    %1 = vector.load %arg2[%c0_1, %c0_2] : memref<216x1xbf16, #tpu.memory_space<vmem>>, vector<216x1xbf16>
    %2 = vector.broadcast %1 : vector<216x1xbf16> to vector<216x1024xbf16>
    %3 = vector.broadcast %0 : vector<1x1024xbf16> to vector<216x1024xbf16>
    %4 = arith.mulf %2, %3 : vector<216x1024xbf16>
    %c0_3 = arith.constant 0 : index
    %c0_4 = arith.constant 0 : index
    %5 = vector.load %arg3[%c0_3, %c0_4] : memref<216x1xbf16, #tpu.memory_space<vmem>>, vector<216x1xbf16>
    %6 = vector.broadcast %5 : vector<216x1xbf16> to vector<216x1024xbf16>
    %7 = arith.addf %4, %6 : vector<216x1024xbf16>
    %cst = arith.constant 5.000000e-01 : bf16
    %8 = vector.broadcast %cst : bf16 to vector<216x1024xbf16>
    %9 = arith.mulf %8, %7 : vector<216x1024xbf16>
    %10 = math.tanh %9 : vector<216x1024xbf16>
    %cst_5 = arith.constant 5.000000e-01 : bf16
    %11 = vector.broadcast %cst_5 : bf16 to vector<216x1024xbf16>
    %12 = arith.mulf %11, %10 : vector<216x1024xbf16>
    %cst_6 = arith.constant 5.000000e-01 : bf16
    %13 = vector.broadcast %cst_6 : bf16 to vector<216x1024xbf16>
    %14 = arith.addf %13, %12 : vector<216x1024xbf16>
    %15 = arith.mulf %7, %14 : vector<216x1024xbf16>
    %c0_7 = arith.constant 0 : index
    %c0_8 = arith.constant 0 : index
    %16 = vector.load %arg4[%c0_7, %c0_8] : memref<9x216xbf16, #tpu.memory_space<vmem>>, vector<9x216xbf16>
    %cst_9 = arith.constant dense<0.000000e+00> : vector<9x1024xf32>
    %17 = tpu.matmul %16, %15, %cst_9 {dimension_numbers = #tpu.dot_dimension_numbers<[1], [0], [0], [1], [0, 0, 1, 1], [], []>} : vector<9x216xbf16>, vector<216x1024xbf16>, vector<9x1024xf32> -> vector<9x1024xf32>
    %c0_10 = arith.constant 0 : index
    %c0_11 = arith.constant 0 : index
    %18 = vector.load %arg5[%c0_10, %c0_11] : memref<9x1xf32, #tpu.memory_space<vmem>>, vector<9x1xf32>
    %19 = vector.broadcast %18 : vector<9x1xf32> to vector<9x1024xf32>
    %20 = arith.addf %17, %19 : vector<9x1024xf32>
    %cst_12 = arith.constant 5.000000e-01 : f32
    %21 = vector.broadcast %cst_12 : f32 to vector<9x1024xf32>
    %22 = arith.mulf %21, %20 : vector<9x1024xf32>
    %23 = math.tanh %22 : vector<9x1024xf32>
    %cst_13 = arith.constant 5.000000e-01 : f32
    %24 = vector.broadcast %cst_13 : f32 to vector<9x1024xf32>
    %25 = arith.mulf %24, %23 : vector<9x1024xf32>
    %cst_14 = arith.constant 5.000000e-01 : f32
    %26 = vector.broadcast %cst_14 : f32 to vector<9x1024xf32>
    %27 = arith.addf %26, %25 : vector<9x1024xf32>
    %28 = arith.mulf %20, %27 : vector<9x1024xf32>
    %c0_15 = arith.constant 0 : index
    %c0_16 = arith.constant 0 : index
    %29 = vector.load %arg6[%c0_15, %c0_16] : memref<3x9xf32, #tpu.memory_space<vmem>>, vector<3x9xf32>
    %cst_17 = arith.constant dense<0.000000e+00> : vector<3x1024xf32>
    %30 = tpu.matmul %29, %28, %cst_17 {dimension_numbers = #tpu.dot_dimension_numbers<[1], [0], [0], [1], [0, 0, 1, 1], [], []>} : vector<3x9xf32>, vector<9x1024xf32>, vector<3x1024xf32> -> vector<3x1024xf32>
    %c0_18 = arith.constant 0 : index
    %c0_19 = arith.constant 0 : index
    %31 = vector.load %arg7[%c0_18, %c0_19] : memref<3x1xf32, #tpu.memory_space<vmem>>, vector<3x1xf32>
    %32 = vector.broadcast %31 : vector<3x1xf32> to vector<3x1024xf32>
    %33 = arith.addf %30, %32 : vector<3x1024xf32>
    %cst_20 = arith.constant 5.000000e-01 : f32
    %34 = vector.broadcast %cst_20 : f32 to vector<3x1024xf32>
    %35 = arith.mulf %34, %33 : vector<3x1024xf32>
    %36 = math.tanh %35 : vector<3x1024xf32>
    %cst_21 = arith.constant 5.000000e-01 : f32
    %37 = vector.broadcast %cst_21 : f32 to vector<3x1024xf32>
    %38 = arith.mulf %37, %36 : vector<3x1024xf32>
    %cst_22 = arith.constant 5.000000e-01 : f32
    %39 = vector.broadcast %cst_22 : f32 to vector<3x1024xf32>
    %40 = arith.addf %39, %38 : vector<3x1024xf32>
    %41 = arith.mulf %33, %40 : vector<3x1024xf32>
    %c0_23 = arith.constant 0 : index
    %c0_24 = arith.constant 0 : index
    %42 = vector.load %arg8[%c0_23, %c0_24] : memref<3x1024xf32, #tpu.memory_space<vmem>>, vector<3x1024xf32>
    tpu.vector_store %arg8[%c0_23, %c0_24], %41 {strides = array<i32>} : memref<3x1024xf32, #tpu.memory_space<vmem>>, vector<3x1024xf32>,
    return
  }
  func.func @transform_0(%arg0: i32) -> (i32, i32) {
    %c0_i32 = arith.constant 0 : i32
    %c0_i32_0 = arith.constant 0 : i32
    return %c0_i32, %arg0 : i32, i32
  }
  func.func @transform_1(%arg0: i32) -> (i32, i32) {
    %c0_i32 = arith.constant 0 : i32
    %c0_i32_0 = arith.constant 0 : i32
    %c0_i32_1 = arith.constant 0 : i32
    return %c0_i32, %c0_i32_0 : i32, i32
  }
  func.func @transform_2(%arg0: i32) -> (i32, i32) {
    %c0_i32 = arith.constant 0 : i32
    %c0_i32_0 = arith.constant 0 : i32
    %c0_i32_1 = arith.constant 0 : i32
    return %c0_i32, %c0_i32_0 : i32, i32
  }
  func.func @transform_3(%arg0: i32) -> (i32, i32) {
    %c0_i32 = arith.constant 0 : i32
    %c0_i32_0 = arith.constant 0 : i32
    %c0_i32_1 = arith.constant 0 : i32
    return %c0_i32, %c0_i32_0 : i32, i32
  }
  func.func @transform_4(%arg0: i32) -> (i32, i32) {
    %c0_i32 = arith.constant 0 : i32
    %c0_i32_0 = arith.constant 0 : i32
    %c0_i32_1 = arith.constant 0 : i32
    return %c0_i32, %c0_i32_0 : i32, i32
  }
  func.func @transform_5(%arg0: i32) -> (i32, i32) {
    %c0_i32 = arith.constant 0 : i32
    %c0_i32_0 = arith.constant 0 : i32
    %c0_i32_1 = arith.constant 0 : i32
    return %c0_i32, %c0_i32_0 : i32, i32
  }
  func.func @transform_6(%arg0: i32) -> (i32, i32) {
    %c0_i32 = arith.constant 0 : i32
    %c0_i32_0 = arith.constant 0 : i32
    %c0_i32_1 = arith.constant 0 : i32
    return %c0_i32, %c0_i32_0 : i32, i32
  }
  func.func @transform_7(%arg0: i32) -> (i32, i32) {
    %c0_i32 = arith.constant 0 : i32
    %c0_i32_0 = arith.constant 0 : i32
    return %c0_i32, %arg0 : i32, i32
  }
}

</mosaic_0001>

<llo_original>
// kernel: tpu_custom_call.1
$region0: #{tpu_custom_call.1}
  #allocation0 [shape = 'u32[]', space=smem, size = 0x4, offset = 0x4, fixed_abs, tag = 'smem constant byte address 0x4 - core index']
  #allocation1 [shape = 'u32[144,128]{1,0:T(1,128)}', space=vmem, size = 0x12000, scoped, tag = 'internal scratch']
  %s0 = inlined_call_operand.vmem [shape: bf16[1,4096], index: 0, kind: input, shape index: {}]
  %s1 = inlined_call_operand.vmem [shape: bf16[216,1], index: 1, kind: input, shape index: {}]
  %s2 = inlined_call_operand.vmem [shape: bf16[216,1], index: 2, kind: input, shape index: {}]
  %s3 = inlined_call_operand.vmem [shape: bf16[9,216], index: 3, kind: input, shape index: {}]
  %s4 = inlined_call_operand.vmem [shape: f32[9,1], index: 4, kind: input, shape index: {}]
  %s5 = inlined_call_operand.vmem [shape: f32[3,9], index: 5, kind: input, shape index: {}]
  %s6 = inlined_call_operand.vmem [shape: f32[3,1], index: 6, kind: input, shape index: {}]
  %s7 = inlined_call_operand.hbm [shape: f32[3,4096], index: 7, kind: output, shape index: {}]
  %s8 = sld [smem:[#allocation0]]
  $region61: #{tpu_custom_call.1} parent=0
    _
  %s10 = ssub.s32 1, %s8
  %s11 = scalar_select 0, %s10, %s8
  $region1: #{tpu_custom_call.1} parent=0
    #allocation2 [shape = 'u8[32768]{0}', space=vmem, size = 0x8000, scoped, tag = 'output window, operand 0']
    #allocation3 [shape = 's32[2]{0}', space=sflag, size = 0x8, scoped, tag = 'scoped memory for tpu_custom_call.1']
    %12 = vsyncpa [#allocation3], 0
    %s13 = scalar_lea.sflag [#allocation3], 1
    %14 = vsyncpa %s13, 0
    loop: start=0, step=1, limit=6
    $region2: #{tpu_custom_call.1} parent=1 // loop_pre_header
      _
    $region3: #{tpu_custom_call.1} parent=1 // loop_header
      %s16 = sphi 0, %s20
      %p17 = scmp.ge.s32.totalorder %s16, 6
      %s26 = sphi 0, %s28
      %s29 = sphi 0, %s26
      %s30 = sphi 0, %s29
      %s46 = sphi 0, %s30
      %s50 = sphi 0, %s50
      %s52 = sphi 0, %s50
      %s53 = sphi 0, %s52
      %s67 = sphi 0, %s53
      %s71 = sphi 0, %s71
      %s73 = sphi 0, %s71
      %s74 = sphi 0, %s73
      %s88 = sphi 0, %s74
      %s92 = sphi 0, %s92
      %s94 = sphi 0, %s92
      %s95 = sphi 0, %s94
      %s109 = sphi 0, %s95
      %s113 = sphi 0, %s113
      %s115 = sphi 0, %s113
      %s116 = sphi 0, %s115
      %s130 = sphi 0, %s116
      %s134 = sphi 0, %s134
      %s136 = sphi 0, %s134
      %s137 = sphi 0, %s136
      %s151 = sphi 0, %s137
      %s155 = sphi 0, %s155
      %s157 = sphi 0, %s155
      %s158 = sphi 0, %s157
      %s172 = sphi 0, %s158
      %s178 = sphi 0, %s180
      %s181 = sphi 0, %s178
      %s182 = sphi 0, %s181
      %s198 = sphi 0, %s182
    $region4: #{tpu_custom_call.1} parent=1 // loop_header_branch
      %19 = sbr.rel (%p17) target = $region8
    $region5: #{tpu_custom_call.1} parent=1 // loop_body
      %s21 = ssub.s32 %s16, 1
      %s22 = ssub.s32 %s16, 2
      %s23 = sadd.s32 %s16, 1
      %s24 = ssub.s32 %s16, %s23
      %p25 = scmp.eq.s32.totalorder %s24, 0
      %s27 = sadd.s32 %s26, 1
      %s28 = scalar_select %p25, %s26, %s27
      %p31 = pneg %p25
      %p32 = scmp.eq.s32.totalorder %s16, 3
      %p33 = por %p31, %p32
      %p34 = scmp.ne.s32.totalorder %s26, %s29
      %p35 = scmp.eq.s32.totalorder %s16, 0
      %p36 = por %p34, %p35
      %p37 = scmp.ne.s32.totalorder %s26, %s29
      %p38 = scmp.eq.s32.totalorder %s21, 3
      %p39 = por %p37, %p38
      %p40 = scmp.ne.s32.totalorder %s29, %s30
      %p41 = scmp.eq.s32.totalorder %s21, 0
      %p42 = por %p40, %p41
      %p43 = scmp.ne.s32.totalorder %s29, %s30
      %p44 = scmp.eq.s32.totalorder %s22, 3
      %p45 = por %p43, %p44
      %p47 = scmp.ne.s32.totalorder %s30, %s46
      %p48 = scmp.eq.s32.totalorder %s22, 0
      %p49 = por %p47, %p48
      %s51 = sadd.s32 %s50, 1
      %p54 = scmp.eq.s32.totalorder %s16, 3
      %p55 = scmp.ne.s32.totalorder %s50, %s52
      %p56 = scmp.eq.s32.totalorder %s16, 0
      %p57 = por %p55, %p56
      %p58 = scmp.ne.s32.totalorder %s50, %s52
      %p59 = scmp.eq.s32.totalorder %s21, 3
      %p60 = por %p58, %p59
      %p61 = scmp.ne.s32.totalorder %s52, %s53
      %p62 = scmp.eq.s32.totalorder %s21, 0
      %p63 = por %p61, %p62
      %p64 = scmp.ne.s32.totalorder %s52, %s53
      %p65 = scmp.eq.s32.totalorder %s22, 3
      %p66 = por %p64, %p65
      %p68 = scmp.ne.s32.totalorder %s53, %s67
      %p69 = scmp.eq.s32.totalorder %s22, 0
      %p70 = por %p68, %p69
      %s72 = sadd.s32 %s71, 1
      %p75 = scmp.eq.s32.totalorder %s16, 3
      %p76 = scmp.ne.s32.totalorder %s71, %s73
      %p77 = scmp.eq.s32.totalorder %s16, 0
      %p78 = por %p76, %p77
      %p79 = scmp.ne.s32.totalorder %s71, %s73
      %p80 = scmp.eq.s32.totalorder %s21, 3
      %p81 = por %p79, %p80
      %p82 = scmp.ne.s32.totalorder %s73, %s74
      %p83 = scmp.eq.s32.totalorder %s21, 0
      %p84 = por %p82, %p83
      %p85 = scmp.ne.s32.totalorder %s73, %s74
      %p86 = scmp.eq.s32.totalorder %s22, 3
      %p87 = por %p85, %p86
      %p89 = scmp.ne.s32.totalorder %s74, %s88
      %p90 = scmp.eq.s32.totalorder %s22, 0
      %p91 = por %p89, %p90
      %s93 = sadd.s32 %s92, 1
      %p96 = scmp.eq.s32.totalorder %s16, 3
      %p97 = scmp.ne.s32.totalorder %s92, %s94
      %p98 = scmp.eq.s32.totalorder %s16, 0
      %p99 = por %p97, %p98
      %p100 = scmp.ne.s32.totalorder %s92, %s94
      %p101 = scmp.eq.s32.totalorder %s21, 3
      %p102 = por %p100, %p101
      %p103 = scmp.ne.s32.totalorder %s94, %s95
      %p104 = scmp.eq.s32.totalorder %s21, 0
      %p105 = por %p103, %p104
      %p106 = scmp.ne.s32.totalorder %s94, %s95
      %p107 = scmp.eq.s32.totalorder %s22, 3
      %p108 = por %p106, %p107
      %p110 = scmp.ne.s32.totalorder %s95, %s109
      %p111 = scmp.eq.s32.totalorder %s22, 0
      %p112 = por %p110, %p111
      %s114 = sadd.s32 %s113, 1
      %p117 = scmp.eq.s32.totalorder %s16, 3
      %p118 = scmp.ne.s32.totalorder %s113, %s115
      %p119 = scmp.eq.s32.totalorder %s16, 0
      %p120 = por %p118, %p119
      %p121 = scmp.ne.s32.totalorder %s113, %s115
      %p122 = scmp.eq.s32.totalorder %s21, 3
      %p123 = por %p121, %p122
      %p124 = scmp.ne.s32.totalorder %s115, %s116
      %p125 = scmp.eq.s32.totalorder %s21, 0
      %p126 = por %p124, %p125
      %p127 = scmp.ne.s32.totalorder %s115, %s116
      %p128 = scmp.eq.s32.totalorder %s22, 3
      %p129 = por %p127, %p128
      %p131 = scmp.ne.s32.totalorder %s116, %s130
      %p132 = scmp.eq.s32.totalorder %s22, 0
      %p133 = por %p131, %p132
      %s135 = sadd.s32 %s134, 1
      %p138 = scmp.eq.s32.totalorder %s16, 3
      %p139 = scmp.ne.s32.totalorder %s134, %s136
      %p140 = scmp.eq.s32.totalorder %s16, 0
      %p141 = por %p139, %p140
      %p142 = scmp.ne.s32.totalorder %s134, %s136
      %p143 = scmp.eq.s32.totalorder %s21, 3
      %p144 = por %p142, %p143
      %p145 = scmp.ne.s32.totalorder %s136, %s137
      %p146 = scmp.eq.s32.totalorder %s21, 0
      %p147 = por %p145, %p146
      %p148 = scmp.ne.s32.totalorder %s136, %s137
      %p149 = scmp.eq.s32.totalorder %s22, 3
      %p150 = por %p148, %p149
      %p152 = scmp.ne.s32.totalorder %s137, %s151
      %p153 = scmp.eq.s32.totalorder %s22, 0
      %p154 = por %p152, %p153
      %s156 = sadd.s32 %s155, 1
      %p159 = scmp.eq.s32.totalorder %s16, 3
      %p160 = scmp.ne.s32.totalorder %s155, %s157
      %p161 = scmp.eq.s32.totalorder %s16, 0
      %p162 = por %p160, %p161
      %p163 = scmp.ne.s32.totalorder %s155, %s157
      %p164 = scmp.eq.s32.totalorder %s21, 3
      %p165 = por %p163, %p164
      %p166 = scmp.ne.s32.totalorder %s157, %s158
      %p167 = scmp.eq.s32.totalorder %s21, 0
      %p168 = por %p166, %p167
      %p169 = scmp.ne.s32.totalorder %s157, %s158
      %p170 = scmp.eq.s32.totalorder %s22, 3
      %p171 = por %p169, %p170
      %p173 = scmp.ne.s32.totalorder %s158, %s172
      %p174 = scmp.eq.s32.totalorder %s22, 0
      %p175 = por %p173, %p174
      %s176 = ssub.s32 %s16, %s23
      %p177 = scmp.eq.s32.totalorder %s176, 0
      %s179 = sadd.s32 %s178, 1
      %s180 = scalar_select %p177, %s178, %s179
      %p183 = pneg %p177
      %p184 = scmp.eq.s32.totalorder %s16, 3
      %p185 = por %p183, %p184
      %p186 = scmp.ne.s32.totalorder %s178, %s181
      %p187 = scmp.eq.s32.totalorder %s16, 0
      %p188 = por %p186, %p187
      %p189 = scmp.ne.s32.totalorder %s178, %s181
      %p190 = scmp.eq.s32.totalorder %s21, 3
      %p191 = por %p189, %p190
      %p192 = scmp.ne.s32.totalorder %s181, %s182
      %p193 = scmp.eq.s32.totalorder %s21, 0
      %p194 = por %p192, %p193
      %p195 = scmp.ne.s32.totalorder %s181, %s182
      %p196 = scmp.eq.s32.totalorder %s22, 3
      %p197 = por %p195, %p196
      %p199 = scmp.ne.s32.totalorder %s182, %s198
      %p200 = scmp.eq.s32.totalorder %s22, 0
      %p201 = por %p199, %p200
      %p202 = scmp.le.s32.totalorder 1, %s16
      %p203 = scmp.lt.s32.totalorder %s16, 5
      %p204 = pnand %p202, %p203
      %p205 = pneg %p204
      // Predicated region
      $region9: #{tpu_custom_call.1} parent=5 // pred_check
        _
      $region10: #{tpu_custom_call.1} parent=5 // pred_check_branch
        %207 = sbr.rel (%p204) target = $region12
      $region11: #{tpu_custom_call.1} parent=5 // pred_region
        %s208 = ssub.s32 %s16, 1
        // Predicated region
        $region13: #{tpu_custom_call.1} parent=11 // pred_check
          %p209 = pneg %p63
        $region14: #{tpu_custom_call.1} parent=11 // pred_check_branch
          %211 = sbr.rel (%p209) target = $region16
        $region15: #{tpu_custom_call.1} parent=11 // pred_region
          _
        $region16: #{tpu_custom_call.1} parent=11 // pred_fallthru
          _
        // Predicated region
        $region17: #{tpu_custom_call.1} parent=11 // pred_check
          %p212 = pneg %p84
        $region18: #{tpu_custom_call.1} parent=11 // pred_check_branch
          %214 = sbr.rel (%p212) target = $region20
        $region19: #{tpu_custom_call.1} parent=11 // pred_region
          _
        $region20: #{tpu_custom_call.1} parent=11 // pred_fallthru
          _
        // Predicated region
        $region21: #{tpu_custom_call.1} parent=11 // pred_check
          %p215 = pneg %p105
        $region22: #{tpu_custom_call.1} parent=11 // pred_check_branch
          %217 = sbr.rel (%p215) target = $region24
        $region23: #{tpu_custom_call.1} parent=11 // pred_region
          _
        $region24: #{tpu_custom_call.1} parent=11 // pred_fallthru
          _
        // Predicated region
        $region25: #{tpu_custom_call.1} parent=11 // pred_check
          %p218 = pneg %p126
        $region26: #{tpu_custom_call.1} parent=11 // pred_check_branch
          %220 = sbr.rel (%p218) target = $region28
        $region27: #{tpu_custom_call.1} parent=11 // pred_region
          _
        $region28: #{tpu_custom_call.1} parent=11 // pred_fallthru
          _
        // Predicated region
        $region29: #{tpu_custom_call.1} parent=11 // pred_check
          %p221 = pneg %p147
        $region30: #{tpu_custom_call.1} parent=11 // pred_check_branch
          %223 = sbr.rel (%p221) target = $region32
        $region31: #{tpu_custom_call.1} parent=11 // pred_region
          _
        $region32: #{tpu_custom_call.1} parent=11 // pred_fallthru
          _
        // Predicated region
        $region33: #{tpu_custom_call.1} parent=11 // pred_check
          %p224 = pneg %p168
        $region34: #{tpu_custom_call.1} parent=11 // pred_check_branch
          %226 = sbr.rel (%p224) target = $region36
        $region35: #{tpu_custom_call.1} parent=11 // pred_region
          _
        $region36: #{tpu_custom_call.1} parent=11 // pred_fallthru
          _
      $region12: #{tpu_custom_call.1} parent=5 // pred_fallthru
        _
      %p227 = scmp.lt.s32.totalorder %s16, 4
      // Predicated region
      $region37: #{tpu_custom_call.1} parent=5 // pred_check
        %p228 = pneg %p227
      $region38: #{tpu_custom_call.1} parent=5 // pred_check_branch
        %230 = sbr.rel (%p228) target = $region40
      $region39: #{tpu_custom_call.1} parent=5 // pred_region
        // Predicated region
        $region41: #{tpu_custom_call.1} parent=39 // pred_check
          %p231 = pneg %p36
        $region42: #{tpu_custom_call.1} parent=39 // pred_check_branch
          %233 = sbr.rel (%p231) target = $region44
        $region43: #{tpu_custom_call.1} parent=39 // pred_region
          %s234 = smul.u32 8, %s16
          %p235 = scmp.lt.s32.totalorder %s234, 31
          %s236 = scalar_select %p235, %s234, 31
          %s237 = scalar_lea.vmem %s0, %s236
          %s238 = smul.u32 8, %s16
        $region44: #{tpu_custom_call.1} parent=39 // pred_fallthru
          _
      $region40: #{tpu_custom_call.1} parent=5 // pred_fallthru
        _
      %p239 = scmp.le.s32.totalorder 1, %s16
      %p240 = scmp.lt.s32.totalorder %s16, 5
      %p241 = pnand %p239, %p240
      %p242 = pneg %p241
      // Predicated region
      $region45: #{tpu_custom_call.1} parent=5 // pred_check
        _
      $region46: #{tpu_custom_call.1} parent=5 // pred_check_branch
        %244 = sbr.rel (%p241) target = $region48
      $region47: #{tpu_custom_call.1} parent=5 // pred_region
        %s245 = ssub.s32 %s16, 1
        %s246 = smul.u32 8, %s21
        %p247 = scmp.lt.s32.totalorder %s246, 31
        %s248 = scalar_select %p247, %s246, 31
        %s249 = scalar_lea.vmem %s0, %s248
        %p250 = pneg %p42
        %p251 = pneg %p39
        %p252 = pneg %p63
        %p253 = pneg %p60
        %p254 = pneg %p84
        %p255 = pneg %p81
        %p256 = pneg %p105
        %p257 = pneg %p102
        %p258 = pneg %p126
        %p259 = pneg %p123
        %p260 = pneg %p147
        %p261 = pneg %p144
        %p262 = pneg %p168
        %p263 = pneg %p165
        %p264 = pneg %p194
        %p265 = pneg %p191
        %s266 = sand.u32 %s181, 1
        %s267 = scalar_lea.sflag [#allocation3], %s266
        %s268 = sand.u32 %s181, 1
        %s269 = smul.addr %s268, 32
        %s270 = scalar_lea.vmem [#allocation2], %s269
        %s271 = smul.u32 8, %s21
        %p272 = scmp.lt.s32.totalorder %s271, 31
        %s273 = scalar_select %p272, %s271, 31
        %s274 = scalar_lea.vmem %s0, %s273
        %s275 = smul.u32 8, %s21
        %s276 = smul.u32 8, %s21
        %v279 = vld [vmem:[%s274] sm:$0xff]
        %v280 = vld [vmem:[%s1] sm:$0xf]
        %v281 = vld [vmem:[%s1 + $0x4] sm:$0xf]
        %v282 = vld [vmem:[%s1 + $0x8] sm:$0xf]
        %v283 = vld [vmem:[%s1 + $0xc] sm:$0xf]
        %v284 = vld [vmem:[%s1 + $0x10] sm:$0xf]
        %v285 = vld [vmem:[%s1 + $0x14] sm:$0xf]
        %v286 = vld [vmem:[%s1 + $0x18] sm:$0xf]
        %v287 = vld [vmem:[%s1 + $0x1c] sm:$0xf]
        %v288 = vld [vmem:[%s1 + $0x20] sm:$0xf]
        %v289 = vld [vmem:[%s1 + $0x24] sm:$0xf]
        %v290 = vld [vmem:[%s1 + $0x28] sm:$0xf]
        %v291 = vld [vmem:[%s1 + $0x2c] sm:$0xf]
        %v292 = vld [vmem:[%s1 + $0x30] sm:$0xf]
        %v293 = vld [vmem:[%s1 + $0x34] sm:$0xf]
        %v294 = vld [vmem:[%s1 + $0x38] sm:$0xf]
        %v295 = vld [vmem:[%s1 + $0x3c] sm:$0xf]
        %v296 = vld [vmem:[%s1 + $0x40] sm:$0xf]
        %v297 = vld [vmem:[%s1 + $0x44] sm:$0xf]
        %v298 = vld [vmem:[%s1 + $0x48] sm:$0xf]
        %v299 = vld [vmem:[%s1 + $0x4c] sm:$0xf]
        %v300 = vld [vmem:[%s1 + $0x50] sm:$0xf]
        %v301 = vld [vmem:[%s1 + $0x54] sm:$0xf]
        %v302 = vld [vmem:[%s1 + $0x58] sm:$0xf]
        %v303 = vld [vmem:[%s1 + $0x5c] sm:$0xf]
        %v304 = vld [vmem:[%s1 + $0x60] sm:$0xf]
        %v305 = vld [vmem:[%s1 + $0x64] sm:$0xf]
        %v306 = vld [vmem:[%s1 + $0x68] sm:$0xf]
        %308 = vset.pattern.permute.xlu0 0
        %309 = vperm.xlu0 %308, %v280
        %v310 = vpop.permute.xlu0 %309
        %v313 = vunpack.c.l.s4 839922192
        %v314 = vunpack.c.0.s8 %v313
        %v315 = vlaneseq
        %v316 = vshrl.u32 %v315, 7
        %v317 = vsub.s32 %v314, %v316
        %v318 = vrot.slane %v310, %v317
        %320 = vset.pattern.permute.xlu0 0
        %321 = vperm.xlu0 %320, %v281
        %v322 = vpop.permute.xlu0 %321
        %v325 = vunpack.c.l.s4 839922192
        %v326 = vunpack.c.0.s8 %v325
        %v327 = vlaneseq
        %v328 = vshrl.u32 %v327, 7
        %v329 = vsub.s32 %v326, %v328
        %v330 = vrot.slane %v322, %v329
        %332 = vset.pattern.permute.xlu0 0
        %333 = vperm.xlu0 %332, %v282
        %v334 = vpop.permute.xlu0 %333
        %v337 = vunpack.c.l.s4 839922192
        %v338 = vunpack.c.0.s8 %v337
        %v339 = vlaneseq
        %v340 = vshrl.u32 %v339, 7
        %v341 = vsub.s32 %v338, %v340
        %v342 = vrot.slane %v334, %v341
        %344 = vset.pattern.permute.xlu0 0
        %345 = vperm.xlu0 %344, %v283
        %v346 = vpop.permute.xlu0 %345
        %v349 = vunpack.c.l.s4 839922192
        %v350 = vunpack.c.0.s8 %v349
        %v351 = vlaneseq
        %v352 = vshrl.u32 %v351, 7
        %v353 = vsub.s32 %v350, %v352
        %v354 = vrot.slane %v346, %v353
        %356 = vset.pattern.permute.xlu0 0
        %357 = vperm.xlu0 %356, %v284
        %v358 = vpop.permute.xlu0 %357
        %v361 = vunpack.c.l.s4 839922192
        %v362 = vunpack.c.0.s8 %v361
        %v363 = vlaneseq
        %v364 = vshrl.u32 %v363, 7
        %v365 = vsub.s32 %v362, %v364
        %v366 = vrot.slane %v358, %v365
        %368 = vset.pattern.permute.xlu0 0
        %369 = vperm.xlu0 %368, %v285
        %v370 = vpop.permute.xlu0 %369
        %v373 = vunpack.c.l.s4 839922192
        %v374 = vunpack.c.0.s8 %v373
        %v375 = vlaneseq
        %v376 = vshrl.u32 %v375, 7
        %v377 = vsub.s32 %v374, %v376
        %v378 = vrot.slane %v370, %v377
        %380 = vset.pattern.permute.xlu0 0
        %381 = vperm.xlu0 %380, %v286
        %v382 = vpop.permute.xlu0 %381
        %v385 = vunpack.c.l.s4 839922192
        %v386 = vunpack.c.0.s8 %v385
        %v387 = vlaneseq
        %v388 = vshrl.u32 %v387, 7
        %v389 = vsub.s32 %v386, %v388
        %v390 = vrot.slane %v382, %v389
        %392 = vset.pattern.permute.xlu0 0
        %393 = vperm.xlu0 %392, %v287
        %v394 = vpop.permute.xlu0 %393
        %v397 = vunpack.c.l.s4 839922192
        %v398 = vunpack.c.0.s8 %v397
        %v399 = vlaneseq
        %v400 = vshrl.u32 %v399, 7
        %v401 = vsub.s32 %v398, %v400
        %v402 = vrot.slane %v394, %v401
        %404 = vset.pattern.permute.xlu0 0
        %405 = vperm.xlu0 %404, %v288
        %v406 = vpop.permute.xlu0 %405
        %v409 = vunpack.c.l.s4 839922192
        %v410 = vunpack.c.0.s8 %v409
        %v411 = vlaneseq
        %v412 = vshrl.u32 %v411, 7
        %v413 = vsub.s32 %v410, %v412
        %v414 = vrot.slane %v406, %v413
        %416 = vset.pattern.permute.xlu0 0
        %417 = vperm.xlu0 %416, %v289
        %v418 = vpop.permute.xlu0 %417
        %v421 = vunpack.c.l.s4 839922192
        %v422 = vunpack.c.0.s8 %v421
        %v423 = vlaneseq
        %v424 = vshrl.u32 %v423, 7
        %v425 = vsub.s32 %v422, %v424
        %v426 = vrot.slane %v418, %v425
        %428 = vset.pattern.permute.xlu0 0
        %429 = vperm.xlu0 %428, %v290
        %v430 = vpop.permute.xlu0 %429
        %v433 = vunpack.c.l.s4 839922192
        %v434 = vunpack.c.0.s8 %v433
        %v435 = vlaneseq
        %v436 = vshrl.u32 %v435, 7
        %v437 = vsub.s32 %v434, %v436
        %v438 = vrot.slane %v430, %v437
        %440 = vset.pattern.permute.xlu0 0
        %441 = vperm.xlu0 %440, %v291
        %v442 = vpop.permute.xlu0 %441
        %v445 = vunpack.c.l.s4 839922192
        %v446 = vunpack.c.0.s8 %v445
        %v447 = vlaneseq
        %v448 = vshrl.u32 %v447, 7
        %v449 = vsub.s32 %v446, %v448
        %v450 = vrot.slane %v442, %v449
        %452 = vset.pattern.permute.xlu0 0
        %453 = vperm.xlu0 %452, %v292
        %v454 = vpop.permute.xlu0 %453
        %v457 = vunpack.c.l.s4 839922192
        %v458 = vunpack.c.0.s8 %v457
        %v459 = vlaneseq
        %v460 = vshrl.u32 %v459, 7
        %v461 = vsub.s32 %v458, %v460
        %v462 = vrot.slane %v454, %v461
        %464 = vset.pattern.permute.xlu0 0
        %465 = vperm.xlu0 %464, %v293
        %v466 = vpop.permute.xlu0 %465
        %v469 = vunpack.c.l.s4 839922192
        %v470 = vunpack.c.0.s8 %v469
        %v471 = vlaneseq
        %v472 = vshrl.u32 %v471, 7
        %v473 = vsub.s32 %v470, %v472
        %v474 = vrot.slane %v466, %v473
        %476 = vset.pattern.permute.xlu0 0
        %477 = vperm.xlu0 %476, %v294
        %v478 = vpop.permute.xlu0 %477
        %v481 = vunpack.c.l.s4 839922192
        %v482 = vunpack.c.0.s8 %v481
        %v483 = vlaneseq
        %v484 = vshrl.u32 %v483, 7
        %v485 = vsub.s32 %v482, %v484
        %v486 = vrot.slane %v478, %v485
        %488 = vset.pattern.permute.xlu0 0
        %489 = vperm.xlu0 %488, %v295
        %v490 = vpop.permute.xlu0 %489
        %v493 = vunpack.c.l.s4 839922192
        %v494 = vunpack.c.0.s8 %v493
        %v495 = vlaneseq
        %v496 = vshrl.u32 %v495, 7
        %v497 = vsub.s32 %v494, %v496
        %v498 = vrot.slane %v490, %v497
        %500 = vset.pattern.permute.xlu0 0
        %501 = vperm.xlu0 %500, %v296
        %v502 = vpop.permute.xlu0 %501
        %v505 = vunpack.c.l.s4 839922192
        %v506 = vunpack.c.0.s8 %v505
        %v507 = vlaneseq
        %v508 = vshrl.u32 %v507, 7
        %v509 = vsub.s32 %v506, %v508
        %v510 = vrot.slane %v502, %v509
        %512 = vset.pattern.permute.xlu0 0
        %513 = vperm.xlu0 %512, %v297
        %v514 = vpop.permute.xlu0 %513
        %v517 = vunpack.c.l.s4 839922192
        %v518 = vunpack.c.0.s8 %v517
        %v519 = vlaneseq
        %v520 = vshrl.u32 %v519, 7
        %v521 = vsub.s32 %v518, %v520
        %v522 = vrot.slane %v514, %v521
        %524 = vset.pattern.permute.xlu0 0
        %525 = vperm.xlu0 %524, %v298
        %v526 = vpop.permute.xlu0 %525
        %v529 = vunpack.c.l.s4 839922192
        %v530 = vunpack.c.0.s8 %v529
        %v531 = vlaneseq
        %v532 = vshrl.u32 %v531, 7
        %v533 = vsub.s32 %v530, %v532
        %v534 = vrot.slane %v526, %v533
        %536 = vset.pattern.permute.xlu0 0
        %537 = vperm.xlu0 %536, %v299
        %v538 = vpop.permute.xlu0 %537
        %v541 = vunpack.c.l.s4 839922192
        %v542 = vunpack.c.0.s8 %v541
        %v543 = vlaneseq
        %v544 = vshrl.u32 %v543, 7
        %v545 = vsub.s32 %v542, %v544
        %v546 = vrot.slane %v538, %v545
        %548 = vset.pattern.permute.xlu0 0
        %549 = vperm.xlu0 %548, %v300
        %v550 = vpop.permute.xlu0 %549
        %v553 = vunpack.c.l.s4 839922192
        %v554 = vunpack.c.0.s8 %v553
        %v555 = vlaneseq
        %v556 = vshrl.u32 %v555, 7
        %v557 = vsub.s32 %v554, %v556
        %v558 = vrot.slane %v550, %v557
        %560 = vset.pattern.permute.xlu0 0
        %561 = vperm.xlu0 %560, %v301
        %v562 = vpop.permute.xlu0 %561
        %v565 = vunpack.c.l.s4 839922192
        %v566 = vunpack.c.0.s8 %v565
        %v567 = vlaneseq
        %v568 = vshrl.u32 %v567, 7
        %v569 = vsub.s32 %v566, %v568
        %v570 = vrot.slane %v562, %v569
        %572 = vset.pattern.permute.xlu0 0
        %573 = vperm.xlu0 %572, %v302
        %v574 = vpop.permute.xlu0 %573
        %v577 = vunpack.c.l.s4 839922192
        %v578 = vunpack.c.0.s8 %v577
        %v579 = vlaneseq
        %v580 = vshrl.u32 %v579, 7
        %v581 = vsub.s32 %v578, %v580
        %v582 = vrot.slane %v574, %v581
        %584 = vset.pattern.permute.xlu0 0
        %585 = vperm.xlu0 %584, %v303
        %v586 = vpop.permute.xlu0 %585
        %v589 = vunpack.c.l.s4 839922192
        %v590 = vunpack.c.0.s8 %v589
        %v591 = vlaneseq
        %v592 = vshrl.u32 %v591, 7
        %v593 = vsub.s32 %v590, %v592
        %v594 = vrot.slane %v586, %v593
        %596 = vset.pattern.permute.xlu0 0
        %597 = vperm.xlu0 %596, %v304
        %v598 = vpop.permute.xlu0 %597
        %v601 = vunpack.c.l.s4 839922192
        %v602 = vunpack.c.0.s8 %v601
        %v603 = vlaneseq
        %v604 = vshrl.u32 %v603, 7
        %v605 = vsub.s32 %v602, %v604
        %v606 = vrot.slane %v598, %v605
        %608 = vset.pattern.permute.xlu0 0
        %609 = vperm.xlu0 %608, %v305
        %v610 = vpop.permute.xlu0 %609
        %v613 = vunpack.c.l.s4 839922192
        %v614 = vunpack.c.0.s8 %v613
        %v615 = vlaneseq
        %v616 = vshrl.u32 %v615, 7
        %v617 = vsub.s32 %v614, %v616
        %v618 = vrot.slane %v610, %v617
        %620 = vset.pattern.permute.xlu0 0
        %621 = vperm.xlu0 %620, %v306
        %v622 = vpop.permute.xlu0 %621
        %v625 = vunpack.c.l.s4 839922192
        %v626 = vunpack.c.0.s8 %v625
        %v627 = vlaneseq
        %v628 = vshrl.u32 %v627, 7
        %v629 = vsub.s32 %v626, %v628
        %v630 = vrot.slane %v622, %v629
        %v632 = vcombine.high %v279, %v279
        %v634 = vunpack.c.l.s4 1966171168
        %v635 = vunpack.c.0.s8 %v634
        %v636 = vlaneseq
        %v637 = vshrl.u32 %v636, 7
        %v638 = vsub.s32 %v635, %v637
        %v639 = vrot.slane %v279, %v638
        %v641 = vunpack.c.l.s4 1966171168
        %v642 = vunpack.c.0.s8 %v641
        %v643 = vlaneseq
        %v644 = vshrl.u32 %v643, 7
        %v645 = vsub.s32 %v642, %v644
        %v646 = vrot.slane %v632, %v645
        %v647 = vcombine.high %v639, %v639
        %v648 = vcombine.high %v646, %v646
        %v650 = vunpack.c.l.s4 1966171168
        %v651 = vunpack.c.0.s8 %v650
        %v652 = vlaneseq
        %v653 = vshrl.u32 %v652, 7
        %v654 = vsub.s32 %v651, %v653
        %v655 = vrot.slane %v639, %v654
        %v657 = vunpack.c.l.s4 1966171168
        %v658 = vunpack.c.0.s8 %v657
        %v659 = vlaneseq
        %v660 = vshrl.u32 %v659, 7
        %v661 = vsub.s32 %v658, %v660
        %v662 = vrot.slane %v646, %v661
        %v664 = vunpack.c.l.s4 1966171168
        %v665 = vunpack.c.0.s8 %v664
        %v666 = vlaneseq
        %v667 = vshrl.u32 %v666, 7
        %v668 = vsub.s32 %v665, %v667
        %v669 = vrot.slane %v647, %v668
        %v671 = vunpack.c.l.s4 1966171168
        %v672 = vunpack.c.0.s8 %v671
        %v673 = vlaneseq
        %v674 = vshrl.u32 %v673, 7
        %v675 = vsub.s32 %v672, %v674
        %v676 = vrot.slane %v648, %v675
        %v677 = vcombine.high %v655, %v655
        %v678 = vcombine.high %v662, %v662
        %v679 = vcombine.high %v669, %v669
        %v680 = vcombine.high %v676, %v676
        %v682 = vpack.i.b16 %v655, %v655
        %v684 = vlaneseq
        %v685 = vshrl.u32 %v684, 7
        %v686 = vsub.s32 0, %v685
        %v687 = vrot.slane %v682, %v686
        %v689 = vpack.i.b16 %v669, %v669
        %v691 = vlaneseq
        %v692 = vshrl.u32 %v691, 7
        %v693 = vsub.s32 0, %v692
        %v694 = vrot.slane %v689, %v693
        %v696 = vpack.i.b16 %v677, %v677
        %v698 = vlaneseq
        %v699 = vshrl.u32 %v698, 7
        %v700 = vsub.s32 0, %v699
        %v701 = vrot.slane %v696, %v700
        %v703 = vpack.i.b16 %v679, %v679
        %v705 = vlaneseq
        %v706 = vshrl.u32 %v705, 7
        %v707 = vsub.s32 0, %v706
        %v708 = vrot.slane %v703, %v707
        %v710 = vpack.i.b16 %v662, %v662
        %v712 = vlaneseq
        %v713 = vshrl.u32 %v712, 7
        %v714 = vsub.s32 0, %v713
        %v715 = vrot.slane %v710, %v714
        %v717 = vpack.i.b16 %v676, %v676
        %v719 = vlaneseq
        %v720 = vshrl.u32 %v719, 7
        %v721 = vsub.s32 0, %v720
        %v722 = vrot.slane %v717, %v721
        %v724 = vpack.i.b16 %v678, %v678
        %v726 = vlaneseq
        %v727 = vshrl.u32 %v726, 7
        %v728 = vsub.s32 0, %v727
        %v729 = vrot.slane %v724, %v728
        %v731 = vpack.i.b16 %v680, %v680
        %v733 = vlaneseq
        %v734 = vshrl.u32 %v733, 7
        %v735 = vsub.s32 0, %v734
        %v736 = vrot.slane %v731, %v735
        %v745 = vunpack.c.l.b16 %v687
        %v746 = vunpack.c.l.b16 %v694
        %v747 = vunpack.c.l.b16 %v701
        %v748 = vunpack.c.l.b16 %v708
        %v749 = vunpack.c.l.b16 %v715
        %v750 = vunpack.c.l.b16 %v722
        %v751 = vunpack.c.l.b16 %v729
        %v752 = vunpack.c.l.b16 %v736
        %v753 = vpack.c.b16 %v746, %v745
        %v754 = vpack.c.b16 %v748, %v747
        %v755 = vpack.c.b16 %v750, %v749
        %v756 = vpack.c.b16 %v752, %v751
        %v761 = vmul.bf16 %v318, %v753
        %v762 = vmul.bf16 %v318, %v754
        %v763 = vmul.bf16 %v318, %v755
        %v764 = vmul.bf16 %v318, %v756
        %v765 = vmul.bf16 %v330, %v753
        %v766 = vmul.bf16 %v330, %v754
        %v767 = vmul.bf16 %v330, %v755
        %v768 = vmul.bf16 %v330, %v756
        %v769 = vmul.bf16 %v342, %v753
        %v770 = vmul.bf16 %v342, %v754
        %v771 = vmul.bf16 %v342, %v755
        %v772 = vmul.bf16 %v342, %v756
        %v773 = vmul.bf16 %v354, %v753
        %v774 = vmul.bf16 %v354, %v754
        %v775 = vmul.bf16 %v354, %v755
        %v776 = vmul.bf16 %v354, %v756
        %v777 = vmul.bf16 %v366, %v753
        %v778 = vmul.bf16 %v366, %v754
        %v779 = vmul.bf16 %v366, %v755
        %v780 = vmul.bf16 %v366, %v756
        %v781 = vmul.bf16 %v378, %v753
        %v782 = vmul.bf16 %v378, %v754
        %v783 = vmul.bf16 %v378, %v755
        %v784 = vmul.bf16 %v378, %v756
        %v785 = vmul.bf16 %v390, %v753
        %v786 = vmul.bf16 %v390, %v754
        %v787 = vmul.bf16 %v390, %v755
        %v788 = vmul.bf16 %v390, %v756
        %v789 = vmul.bf16 %v402, %v753
        %v790 = vmul.bf16 %v402, %v754
        %v791 = vmul.bf16 %v402, %v755
        %v792 = vmul.bf16 %v402, %v756
        %v793 = vmul.bf16 %v414, %v753
        %v794 = vmul.bf16 %v414, %v754
        %v795 = vmul.bf16 %v414, %v755
        %v796 = vmul.bf16 %v414, %v756
        %v797 = vmul.bf16 %v426, %v753
        %v798 = vmul.bf16 %v426, %v754
        %v799 = vmul.bf16 %v426, %v755
        %v800 = vmul.bf16 %v426, %v756
        %v801 = vmul.bf16 %v438, %v753
        %v802 = vmul.bf16 %v438, %v754
        %v803 = vmul.bf16 %v438, %v755
        %v804 = vmul.bf16 %v438, %v756
        %v805 = vmul.bf16 %v450, %v753
        %v806 = vmul.bf16 %v450, %v754
        %v807 = vmul.bf16 %v450, %v755
        %v808 = vmul.bf16 %v450, %v756
        %v809 = vmul.bf16 %v462, %v753
        %v810 = vmul.bf16 %v462, %v754
        %v811 = vmul.bf16 %v462, %v755
        %v812 = vmul.bf16 %v462, %v756
        %v813 = vmul.bf16 %v474, %v753
        %v814 = vmul.bf16 %v474, %v754
        %v815 = vmul.bf16 %v474, %v755
        %v816 = vmul.bf16 %v474, %v756
        %v817 = vmul.bf16 %v486, %v753
        %v818 = vmul.bf16 %v486, %v754
        %v819 = vmul.bf16 %v486, %v755
        %v820 = vmul.bf16 %v486, %v756
        %v821 = vmul.bf16 %v498, %v753
        %v822 = vmul.bf16 %v498, %v754
        %v823 = vmul.bf16 %v498, %v755
        %v824 = vmul.bf16 %v498, %v756
        %v825 = vmul.bf16 %v510, %v753
        %v826 = vmul.bf16 %v510, %v754
        %v827 = vmul.bf16 %v510, %v755
        %v828 = vmul.bf16 %v510, %v756
        %v829 = vmul.bf16 %v522, %v753
        %v830 = vmul.bf16 %v522, %v754
        %v831 = vmul.bf16 %v522, %v755
        %v832 = vmul.bf16 %v522, %v756
        %v833 = vmul.bf16 %v534, %v753
        %v834 = vmul.bf16 %v534, %v754
        %v835 = vmul.bf16 %v534, %v755
        %v836 = vmul.bf16 %v534, %v756
        %v837 = vmul.bf16 %v546, %v753
        %v838 = vmul.bf16 %v546, %v754
        %v839 = vmul.bf16 %v546, %v755
        %v840 = vmul.bf16 %v546, %v756
        %v841 = vmul.bf16 %v558, %v753
        %v842 = vmul.bf16 %v558, %v754
        %v843 = vmul.bf16 %v558, %v755
        %v844 = vmul.bf16 %v558, %v756
        %v845 = vmul.bf16 %v570, %v753
        %v846 = vmul.bf16 %v570, %v754
        %v847 = vmul.bf16 %v570, %v755
        %v848 = vmul.bf16 %v570, %v756
        %v849 = vmul.bf16 %v582, %v753
        %v850 = vmul.bf16 %v582, %v754
        %v851 = vmul.bf16 %v582, %v755
        %v852 = vmul.bf16 %v582, %v756
        %v853 = vmul.bf16 %v594, %v753
        %v854 = vmul.bf16 %v594, %v754
        %v855 = vmul.bf16 %v594, %v755
        %v856 = vmul.bf16 %v594, %v756
        %v857 = vmul.bf16 %v606, %v753
        %v858 = vmul.bf16 %v606, %v754
        %v859 = vmul.bf16 %v606, %v755
        %v860 = vmul.bf16 %v606, %v756
        %v861 = vmul.bf16 %v618, %v753
        %v862 = vmul.bf16 %v618, %v754
        %v863 = vmul.bf16 %v618, %v755
        %v864 = vmul.bf16 %v618, %v756
        %v865 = vmul.bf16 %v630, %v753
        %v866 = vmul.bf16 %v630, %v754
        %v867 = vmul.bf16 %v630, %v755
        %v868 = vmul.bf16 %v630, %v756
        %v869 = vld [vmem:[%s2] sm:$0xf]
        %v870 = vld [vmem:[%s2 + $0x4] sm:$0xf]
        %v871 = vld [vmem:[%s2 + $0x8] sm:$0xf]
        %v872 = vld [vmem:[%s2 + $0xc] sm:$0xf]
        %v873 = vld [vmem:[%s2 + $0x10] sm:$0xf]
        %v874 = vld [vmem:[%s2 + $0x14] sm:$0xf]
        %v875 = vld [vmem:[%s2 + $0x18] sm:$0xf]
        %v876 = vld [vmem:[%s2 + $0x1c] sm:$0xf]
        %v877 = vld [vmem:[%s2 + $0x20] sm:$0xf]
        %v878 = vld [vmem:[%s2 + $0x24] sm:$0xf]
        %v879 = vld [vmem:[%s2 + $0x28] sm:$0xf]
        %v880 = vld [vmem:[%s2 + $0x2c] sm:$0xf]
        %v881 = vld [vmem:[%s2 + $0x30] sm:$0xf]
        %v882 = vld [vmem:[%s2 + $0x34] sm:$0xf]
        %v883 = vld [vmem:[%s2 + $0x38] sm:$0xf]
        %v884 = vld [vmem:[%s2 + $0x3c] sm:$0xf]
        %v885 = vld [vmem:[%s2 + $0x40] sm:$0xf]
        %v886 = vld [vmem:[%s2 + $0x44] sm:$0xf]
        %v887 = vld [vmem:[%s2 + $0x48] sm:$0xf]
        %v888 = vld [vmem:[%s2 + $0x4c] sm:$0xf]
        %v889 = vld [vmem:[%s2 + $0x50] sm:$0xf]
        %v890 = vld [vmem:[%s2 + $0x54] sm:$0xf]
        %v891 = vld [vmem:[%s2 + $0x58] sm:$0xf]
        %v892 = vld [vmem:[%s2 + $0x5c] sm:$0xf]
        %v893 = vld [vmem:[%s2 + $0x60] sm:$0xf]
        %v894 = vld [vmem:[%s2 + $0x64] sm:$0xf]
        %v895 = vld [vmem:[%s2 + $0x68] sm:$0xf]
        %897 = vset.pattern.permute.xlu0 0
        %898 = vperm.xlu0 %897, %v869
        %v899 = vpop.permute.xlu0 %898
        %v902 = vunpack.c.l.s4 839922192
        %v903 = vunpack.c.0.s8 %v902
        %v904 = vlaneseq
        %v905 = vshrl.u32 %v904, 7
        %v906 = vsub.s32 %v903, %v905
        %v907 = vrot.slane %v899, %v906
        %909 = vset.pattern.permute.xlu0 0
        %910 = vperm.xlu0 %909, %v870
        %v911 = vpop.permute.xlu0 %910
        %v914 = vunpack.c.l.s4 839922192
        %v915 = vunpack.c.0.s8 %v914
        %v916 = vlaneseq
        %v917 = vshrl.u32 %v916, 7
        %v918 = vsub.s32 %v915, %v917
        %v919 = vrot.slane %v911, %v918
        %921 = vset.pattern.permute.xlu0 0
        %922 = vperm.xlu0 %921, %v871
        %v923 = vpop.permute.xlu0 %922
        %v926 = vunpack.c.l.s4 839922192
        %v927 = vunpack.c.0.s8 %v926
        %v928 = vlaneseq
        %v929 = vshrl.u32 %v928, 7
        %v930 = vsub.s32 %v927, %v929
        %v931 = vrot.slane %v923, %v930
        %933 = vset.pattern.permute.xlu0 0
        %934 = vperm.xlu0 %933, %v872
        %v935 = vpop.permute.xlu0 %934
        %v938 = vunpack.c.l.s4 839922192
        %v939 = vunpack.c.0.s8 %v938
        %v940 = vlaneseq
        %v941 = vshrl.u32 %v940, 7
        %v942 = vsub.s32 %v939, %v941
        %v943 = vrot.slane %v935, %v942
        %945 = vset.pattern.permute.xlu0 0
        %946 = vperm.xlu0 %945, %v873
        %v947 = vpop.permute.xlu0 %946
        %v950 = vunpack.c.l.s4 839922192
        %v951 = vunpack.c.0.s8 %v950
        %v952 = vlaneseq
        %v953 = vshrl.u32 %v952, 7
        %v954 = vsub.s32 %v951, %v953
        %v955 = vrot.slane %v947, %v954
        %957 = vset.pattern.permute.xlu0 0
        %958 = vperm.xlu0 %957, %v874
        %v959 = vpop.permute.xlu0 %958
        %v962 = vunpack.c.l.s4 839922192
        %v963 = vunpack.c.0.s8 %v962
        %v964 = vlaneseq
        %v965 = vshrl.u32 %v964, 7
        %v966 = vsub.s32 %v963, %v965
        %v967 = vrot.slane %v959, %v966
        %969 = vset.pattern.permute.xlu0 0
        %970 = vperm.xlu0 %969, %v875
        %v971 = vpop.permute.xlu0 %970
        %v974 = vunpack.c.l.s4 839922192
        %v975 = vunpack.c.0.s8 %v974
        %v976 = vlaneseq
        %v977 = vshrl.u32 %v976, 7
        %v978 = vsub.s32 %v975, %v977
        %v979 = vrot.slane %v971, %v978
        %981 = vset.pattern.permute.xlu0 0
        %982 = vperm.xlu0 %981, %v876
        %v983 = vpop.permute.xlu0 %982
        %v986 = vunpack.c.l.s4 839922192
        %v987 = vunpack.c.0.s8 %v986
        %v988 = vlaneseq
        %v989 = vshrl.u32 %v988, 7
        %v990 = vsub.s32 %v987, %v989
        %v991 = vrot.slane %v983, %v990
        %993 = vset.pattern.permute.xlu0 0
        %994 = vperm.xlu0 %993, %v877
        %v995 = vpop.permute.xlu0 %994
        %v998 = vunpack.c.l.s4 839922192
        %v999 = vunpack.c.0.s8 %v998
        %v1000 = vlaneseq
        %v1001 = vshrl.u32 %v1000, 7
        %v1002 = vsub.s32 %v999, %v1001
        %v1003 = vrot.slane %v995, %v1002
        %1005 = vset.pattern.permute.xlu0 0
        %1006 = vperm.xlu0 %1005, %v878
        %v1007 = vpop.permute.xlu0 %1006
        %v1010 = vunpack.c.l.s4 839922192
        %v1011 = vunpack.c.0.s8 %v1010
        %v1012 = vlaneseq
        %v1013 = vshrl.u32 %v1012, 7
        %v1014 = vsub.s32 %v1011, %v1013
        %v1015 = vrot.slane %v1007, %v1014
        %1017 = vset.pattern.permute.xlu0 0
        %1018 = vperm.xlu0 %1017, %v879
        %v1019 = vpop.permute.xlu0 %1018
        %v1022 = vunpack.c.l.s4 839922192
        %v1023 = vunpack.c.0.s8 %v1022
        %v1024 = vlaneseq
        %v1025 = vshrl.u32 %v1024, 7
        %v1026 = vsub.s32 %v1023, %v1025
        %v1027 = vrot.slane %v1019, %v1026
        %1029 = vset.pattern.permute.xlu0 0
        %1030 = vperm.xlu0 %1029, %v880
        %v1031 = vpop.permute.xlu0 %1030
        %v1034 = vunpack.c.l.s4 839922192
        %v1035 = vunpack.c.0.s8 %v1034
        %v1036 = vlaneseq
        %v1037 = vshrl.u32 %v1036, 7
        %v1038 = vsub.s32 %v1035, %v1037
        %v1039 = vrot.slane %v1031, %v1038
        %1041 = vset.pattern.permute.xlu0 0
        %1042 = vperm.xlu0 %1041, %v881
        %v1043 = vpop.permute.xlu0 %1042
        %v1046 = vunpack.c.l.s4 839922192
        %v1047 = vunpack.c.0.s8 %v1046
        %v1048 = vlaneseq
        %v1049 = vshrl.u32 %v1048, 7
        %v1050 = vsub.s32 %v1047, %v1049
        %v1051 = vrot.slane %v1043, %v1050
        %1053 = vset.pattern.permute.xlu0 0
        %1054 = vperm.xlu0 %1053, %v882
        %v1055 = vpop.permute.xlu0 %1054
        %v1058 = vunpack.c.l.s4 839922192
        %v1059 = vunpack.c.0.s8 %v1058
        %v1060 = vlaneseq
        %v1061 = vshrl.u32 %v1060, 7
        %v1062 = vsub.s32 %v1059, %v1061
        %v1063 = vrot.slane %v1055, %v1062
        %1065 = vset.pattern.permute.xlu0 0
        %1066 = vperm.xlu0 %1065, %v883
        %v1067 = vpop.permute.xlu0 %1066
        %v1070 = vunpack.c.l.s4 839922192
        %v1071 = vunpack.c.0.s8 %v1070
        %v1072 = vlaneseq
        %v1073 = vshrl.u32 %v1072, 7
        %v1074 = vsub.s32 %v1071, %v1073
        %v1075 = vrot.slane %v1067, %v1074
        %1077 = vset.pattern.permute.xlu0 0
        %1078 = vperm.xlu0 %1077, %v884
        %v1079 = vpop.permute.xlu0 %1078
        %v1082 = vunpack.c.l.s4 839922192
        %v1083 = vunpack.c.0.s8 %v1082
        %v1084 = vlaneseq
        %v1085 = vshrl.u32 %v1084, 7
        %v1086 = vsub.s32 %v1083, %v1085
        %v1087 = vrot.slane %v1079, %v1086
        %1089 = vset.pattern.permute.xlu0 0
        %1090 = vperm.xlu0 %1089, %v885
        %v1091 = vpop.permute.xlu0 %1090
        %v1094 = vunpack.c.l.s4 839922192
        %v1095 = vunpack.c.0.s8 %v1094
        %v1096 = vlaneseq
        %v1097 = vshrl.u32 %v1096, 7
        %v1098 = vsub.s32 %v1095, %v1097
        %v1099 = vrot.slane %v1091, %v1098
        %1101 = vset.pattern.permute.xlu0 0
        %1102 = vperm.xlu0 %1101, %v886
        %v1103 = vpop.permute.xlu0 %1102
        %v1106 = vunpack.c.l.s4 839922192
        %v1107 = vunpack.c.0.s8 %v1106
        %v1108 = vlaneseq
        %v1109 = vshrl.u32 %v1108, 7
        %v1110 = vsub.s32 %v1107, %v1109
        %v1111 = vrot.slane %v1103, %v1110
        %1113 = vset.pattern.permute.xlu0 0
        %1114 = vperm.xlu0 %1113, %v887
        %v1115 = vpop.permute.xlu0 %1114
        %v1118 = vunpack.c.l.s4 839922192
        %v1119 = vunpack.c.0.s8 %v1118
        %v1120 = vlaneseq
        %v1121 = vshrl.u32 %v1120, 7
        %v1122 = vsub.s32 %v1119, %v1121
        %v1123 = vrot.slane %v1115, %v1122
        %1125 = vset.pattern.permute.xlu0 0
        %1126 = vperm.xlu0 %1125, %v888
        %v1127 = vpop.permute.xlu0 %1126
        %v1130 = vunpack.c.l.s4 839922192
        %v1131 = vunpack.c.0.s8 %v1130
        %v1132 = vlaneseq
        %v1133 = vshrl.u32 %v1132, 7
        %v1134 = vsub.s32 %v1131, %v1133
        %v1135 = vrot.slane %v1127, %v1134
        %1137 = vset.pattern.permute.xlu0 0
        %1138 = vperm.xlu0 %1137, %v889
        %v1139 = vpop.permute.xlu0 %1138
        %v1142 = vunpack.c.l.s4 839922192
        %v1143 = vunpack.c.0.s8 %v1142
        %v1144 = vlaneseq
        %v1145 = vshrl.u32 %v1144, 7
        %v1146 = vsub.s32 %v1143, %v1145
        %v1147 = vrot.slane %v1139, %v1146
        %1149 = vset.pattern.permute.xlu0 0
        %1150 = vperm.xlu0 %1149, %v890
        %v1151 = vpop.permute.xlu0 %1150
        %v1154 = vunpack.c.l.s4 839922192
        %v1155 = vunpack.c.0.s8 %v1154
        %v1156 = vlaneseq
        %v1157 = vshrl.u32 %v1156, 7
        %v1158 = vsub.s32 %v1155, %v1157
        %v1159 = vrot.slane %v1151, %v1158
        %1161 = vset.pattern.permute.xlu0 0
        %1162 = vperm.xlu0 %1161, %v891
        %v1163 = vpop.permute.xlu0 %1162
        %v1166 = vunpack.c.l.s4 839922192
        %v1167 = vunpack.c.0.s8 %v1166
        %v1168 = vlaneseq
        %v1169 = vshrl.u32 %v1168, 7
        %v1170 = vsub.s32 %v1167, %v1169
        %v1171 = vrot.slane %v1163, %v1170
        %1173 = vset.pattern.permute.xlu0 0
        %1174 = vperm.xlu0 %1173, %v892
        %v1175 = vpop.permute.xlu0 %1174
        %v1178 = vunpack.c.l.s4 839922192
        %v1179 = vunpack.c.0.s8 %v1178
        %v1180 = vlaneseq
        %v1181 = vshrl.u32 %v1180, 7
        %v1182 = vsub.s32 %v1179, %v1181
        %v1183 = vrot.slane %v1175, %v1182
        %1185 = vset.pattern.permute.xlu0 0
        %1186 = vperm.xlu0 %1185, %v893
        %v1187 = vpop.permute.xlu0 %1186
        %v1190 = vunpack.c.l.s4 839922192
        %v1191 = vunpack.c.0.s8 %v1190
        %v1192 = vlaneseq
        %v1193 = vshrl.u32 %v1192, 7
        %v1194 = vsub.s32 %v1191, %v1193
        %v1195 = vrot.slane %v1187, %v1194
        %1197 = vset.pattern.permute.xlu0 0
        %1198 = vperm.xlu0 %1197, %v894
        %v1199 = vpop.permute.xlu0 %1198
        %v1202 = vunpack.c.l.s4 839922192
        %v1203 = vunpack.c.0.s8 %v1202
        %v1204 = vlaneseq
        %v1205 = vshrl.u32 %v1204, 7
        %v1206 = vsub.s32 %v1203, %v1205
        %v1207 = vrot.slane %v1199, %v1206
        %1209 = vset.pattern.permute.xlu0 0
        %1210 = vperm.xlu0 %1209, %v895
        %v1211 = vpop.permute.xlu0 %1210
        %v1214 = vunpack.c.l.s4 839922192
        %v1215 = vunpack.c.0.s8 %v1214
        %v1216 = vlaneseq
        %v1217 = vshrl.u32 %v1216, 7
        %v1218 = vsub.s32 %v1215, %v1217
        %v1219 = vrot.slane %v1211, %v1218
        %v1220 = vadd.bf16 %v761, %v907
        %v1221 = vadd.bf16 %v762, %v907
        %v1222 = vadd.bf16 %v763, %v907
        %v1223 = vadd.bf16 %v764, %v907
        %v1224 = vadd.bf16 %v765, %v919
        %v1225 = vadd.bf16 %v766, %v919
        %v1226 = vadd.bf16 %v767, %v919
        %v1227 = vadd.bf16 %v768, %v919
        %v1228 = vadd.bf16 %v769, %v931
        %v1229 = vadd.bf16 %v770, %v931
        %v1230 = vadd.bf16 %v771, %v931
        %v1231 = vadd.bf16 %v772, %v931
        %v1232 = vadd.bf16 %v773, %v943
        %v1233 = vadd.bf16 %v774, %v943
        %v1234 = vadd.bf16 %v775, %v943
        %v1235 = vadd.bf16 %v776, %v943
        %v1236 = vadd.bf16 %v777, %v955
        %v1237 = vadd.bf16 %v778, %v955
        %v1238 = vadd.bf16 %v779, %v955
        %v1239 = vadd.bf16 %v780, %v955
        %v1240 = vadd.bf16 %v781, %v967
        %v1241 = vadd.bf16 %v782, %v967
        %v1242 = vadd.bf16 %v783, %v967
        %v1243 = vadd.bf16 %v784, %v967
        %v1244 = vadd.bf16 %v785, %v979
        %v1245 = vadd.bf16 %v786, %v979
        %v1246 = vadd.bf16 %v787, %v979
        %v1247 = vadd.bf16 %v788, %v979
        %v1248 = vadd.bf16 %v789, %v991
        %v1249 = vadd.bf16 %v790, %v991
        %v1250 = vadd.bf16 %v791, %v991
        %v1251 = vadd.bf16 %v792, %v991
        %v1252 = vadd.bf16 %v793, %v1003
        %v1253 = vadd.bf16 %v794, %v1003
        %v1254 = vadd.bf16 %v795, %v1003
        %v1255 = vadd.bf16 %v796, %v1003
        %v1256 = vadd.bf16 %v797, %v1015
        %v1257 = vadd.bf16 %v798, %v1015
        %v1258 = vadd.bf16 %v799, %v1015
        %v1259 = vadd.bf16 %v800, %v1015
        %v1260 = vadd.bf16 %v801, %v1027
        %v1261 = vadd.bf16 %v802, %v1027
        %v1262 = vadd.bf16 %v803, %v1027
        %v1263 = vadd.bf16 %v804, %v1027
        %v1264 = vadd.bf16 %v805, %v1039
        %v1265 = vadd.bf16 %v806, %v1039
        %v1266 = vadd.bf16 %v807, %v1039
        %v1267 = vadd.bf16 %v808, %v1039
        %v1268 = vadd.bf16 %v809, %v1051
        %v1269 = vadd.bf16 %v810, %v1051
        %v1270 = vadd.bf16 %v811, %v1051
        %v1271 = vadd.bf16 %v812, %v1051
        %v1272 = vadd.bf16 %v813, %v1063
        %v1273 = vadd.bf16 %v814, %v1063
        %v1274 = vadd.bf16 %v815, %v1063
        %v1275 = vadd.bf16 %v816, %v1063
        %v1276 = vadd.bf16 %v817, %v1075
        %v1277 = vadd.bf16 %v818, %v1075
        %v1278 = vadd.bf16 %v819, %v1075
        %v1279 = vadd.bf16 %v820, %v1075
        %v1280 = vadd.bf16 %v821, %v1087
        %v1281 = vadd.bf16 %v822, %v1087
        %v1282 = vadd.bf16 %v823, %v1087
        %v1283 = vadd.bf16 %v824, %v1087
        %v1284 = vadd.bf16 %v825, %v1099
        %v1285 = vadd.bf16 %v826, %v1099
        %v1286 = vadd.bf16 %v827, %v1099
        %v1287 = vadd.bf16 %v828, %v1099
        %v1288 = vadd.bf16 %v829, %v1111
        %v1289 = vadd.bf16 %v830, %v1111
        %v1290 = vadd.bf16 %v831, %v1111
        %v1291 = vadd.bf16 %v832, %v1111
        %v1292 = vadd.bf16 %v833, %v1123
        %v1293 = vadd.bf16 %v834, %v1123
        %v1294 = vadd.bf16 %v835, %v1123
        %v1295 = vadd.bf16 %v836, %v1123
        %v1296 = vadd.bf16 %v837, %v1135
        %v1297 = vadd.bf16 %v838, %v1135
        %v1298 = vadd.bf16 %v839, %v1135
        %v1299 = vadd.bf16 %v840, %v1135
        %v1300 = vadd.bf16 %v841, %v1147
        %v1301 = vadd.bf16 %v842, %v1147
        %v1302 = vadd.bf16 %v843, %v1147
        %v1303 = vadd.bf16 %v844, %v1147
        %v1304 = vadd.bf16 %v845, %v1159
        %v1305 = vadd.bf16 %v846, %v1159
        %v1306 = vadd.bf16 %v847, %v1159
        %v1307 = vadd.bf16 %v848, %v1159
        %v1308 = vadd.bf16 %v849, %v1171
        %v1309 = vadd.bf16 %v850, %v1171
        %v1310 = vadd.bf16 %v851, %v1171
        %v1311 = vadd.bf16 %v852, %v1171
        %v1312 = vadd.bf16 %v853, %v1183
        %v1313 = vadd.bf16 %v854, %v1183
        %v1314 = vadd.bf16 %v855, %v1183
        %v1315 = vadd.bf16 %v856, %v1183
        %v1316 = vadd.bf16 %v857, %v1195
        %v1317 = vadd.bf16 %v858, %v1195
        %v1318 = vadd.bf16 %v859, %v1195
        %v1319 = vadd.bf16 %v860, %v1195
        %v1320 = vadd.bf16 %v861, %v1207
        %v1321 = vadd.bf16 %v862, %v1207
        %v1322 = vadd.bf16 %v863, %v1207
        %v1323 = vadd.bf16 %v864, %v1207
        %v1324 = vadd.bf16 %v865, %v1219
        %v1325 = vadd.bf16 %v866, %v1219
        %v1326 = vadd.bf16 %v867, %v1219
        %v1327 = vadd.bf16 %v868, %v1219
        %v1328 = vmul.bf16 %v1220, 1056980736
        %v1329 = vmul.bf16 %v1221, 1056980736
        %v1330 = vmul.bf16 %v1222, 1056980736
        %v1331 = vmul.bf16 %v1223, 1056980736
        %v1332 = vmul.bf16 %v1224, 1056980736
        %v1333 = vmul.bf16 %v1225, 1056980736
        %v1334 = vmul.bf16 %v1226, 1056980736
        %v1335 = vmul.bf16 %v1227, 1056980736
        %v1336 = vmul.bf16 %v1228, 1056980736
        %v1337 = vmul.bf16 %v1229, 1056980736
        %v1338 = vmul.bf16 %v1230, 1056980736
        %v1339 = vmul.bf16 %v1231, 1056980736
        %v1340 = vmul.bf16 %v1232, 1056980736
        %v1341 = vmul.bf16 %v1233, 1056980736
        %v1342 = vmul.bf16 %v1234, 1056980736
        %v1343 = vmul.bf16 %v1235, 1056980736
        %v1344 = vmul.bf16 %v1236, 1056980736
        %v1345 = vmul.bf16 %v1237, 1056980736
        %v1346 = vmul.bf16 %v1238, 1056980736
        %v1347 = vmul.bf16 %v1239, 1056980736
        %v1348 = vmul.bf16 %v1240, 1056980736
        %v1349 = vmul.bf16 %v1241, 1056980736
        %v1350 = vmul.bf16 %v1242, 1056980736
        %v1351 = vmul.bf16 %v1243, 1056980736
        %v1352 = vmul.bf16 %v1244, 1056980736
        %v1353 = vmul.bf16 %v1245, 1056980736
        %v1354 = vmul.bf16 %v1246, 1056980736
        %v1355 = vmul.bf16 %v1247, 1056980736
        %v1356 = vmul.bf16 %v1248, 1056980736
        %v1357 = vmul.bf16 %v1249, 1056980736
        %v1358 = vmul.bf16 %v1250, 1056980736
        %v1359 = vmul.bf16 %v1251, 1056980736
        %v1360 = vmul.bf16 %v1252, 1056980736
        %v1361 = vmul.bf16 %v1253, 1056980736
        %v1362 = vmul.bf16 %v1254, 1056980736
        %v1363 = vmul.bf16 %v1255, 1056980736
        %v1364 = vmul.bf16 %v1256, 1056980736
        %v1365 = vmul.bf16 %v1257, 1056980736
        %v1366 = vmul.bf16 %v1258, 1056980736
        %v1367 = vmul.bf16 %v1259, 1056980736
        %v1368 = vmul.bf16 %v1260, 1056980736
        %v1369 = vmul.bf16 %v1261, 1056980736
        %v1370 = vmul.bf16 %v1262, 1056980736
        %v1371 = vmul.bf16 %v1263, 1056980736
        %v1372 = vmul.bf16 %v1264, 1056980736
        %v1373 = vmul.bf16 %v1265, 1056980736
        %v1374 = vmul.bf16 %v1266, 1056980736
        %v1375 = vmul.bf16 %v1267, 1056980736
        %v1376 = vmul.bf16 %v1268, 1056980736
        %v1377 = vmul.bf16 %v1269, 1056980736
        %v1378 = vmul.bf16 %v1270, 1056980736
        %v1379 = vmul.bf16 %v1271, 1056980736
        %v1380 = vmul.bf16 %v1272, 1056980736
        %v1381 = vmul.bf16 %v1273, 1056980736
        %v1382 = vmul.bf16 %v1274, 1056980736
        %v1383 = vmul.bf16 %v1275, 1056980736
        %v1384 = vmul.bf16 %v1276, 1056980736
        %v1385 = vmul.bf16 %v1277, 1056980736
        %v1386 = vmul.bf16 %v1278, 1056980736
        %v1387 = vmul.bf16 %v1279, 1056980736
        %v1388 = vmul.bf16 %v1280, 1056980736
        %v1389 = vmul.bf16 %v1281, 1056980736
        %v1390 = vmul.bf16 %v1282, 1056980736
        %v1391 = vmul.bf16 %v1283, 1056980736
        %v1392 = vmul.bf16 %v1284, 1056980736
        %v1393 = vmul.bf16 %v1285, 1056980736
        %v1394 = vmul.bf16 %v1286, 1056980736
        %v1395 = vmul.bf16 %v1287, 1056980736
        %v1396 = vmul.bf16 %v1288, 1056980736
        %v1397 = vmul.bf16 %v1289, 1056980736
        %v1398 = vmul.bf16 %v1290, 1056980736
        %v1399 = vmul.bf16 %v1291, 1056980736
        %v1400 = vmul.bf16 %v1292, 1056980736
        %v1401 = vmul.bf16 %v1293, 1056980736
        %v1402 = vmul.bf16 %v1294, 1056980736
        %v1403 = vmul.bf16 %v1295, 1056980736
        %v1404 = vmul.bf16 %v1296, 1056980736
        %v1405 = vmul.bf16 %v1297, 1056980736
        %v1406 = vmul.bf16 %v1298, 1056980736
        %v1407 = vmul.bf16 %v1299, 1056980736
        %v1408 = vmul.bf16 %v1300, 1056980736
        %v1409 = vmul.bf16 %v1301, 1056980736
        %v1410 = vmul.bf16 %v1302, 1056980736
        %v1411 = vmul.bf16 %v1303, 1056980736
        %v1412 = vmul.bf16 %v1304, 1056980736
        %v1413 = vmul.bf16 %v1305, 1056980736
        %v1414 = vmul.bf16 %v1306, 1056980736
        %v1415 = vmul.bf16 %v1307, 1056980736
        %v1416 = vmul.bf16 %v1308, 1056980736
        %v1417 = vmul.bf16 %v1309, 1056980736
        %v1418 = vmul.bf16 %v1310, 1056980736
        %v1419 = vmul.bf16 %v1311, 1056980736
        %v1420 = vmul.bf16 %v1312, 1056980736
        %v1421 = vmul.bf16 %v1313, 1056980736
        %v1422 = vmul.bf16 %v1314, 1056980736
        %v1423 = vmul.bf16 %v1315, 1056980736
        %v1424 = vmul.bf16 %v1316, 1056980736
        %v1425 = vmul.bf16 %v1317, 1056980736
        %v1426 = vmul.bf16 %v1318, 1056980736
        %v1427 = vmul.bf16 %v1319, 1056980736
        %v1428 = vmul.bf16 %v1320, 1056980736
        %v1429 = vmul.bf16 %v1321, 1056980736
        %v1430 = vmul.bf16 %v1322, 1056980736
        %v1431 = vmul.bf16 %v1323, 1056980736
        %v1432 = vmul.bf16 %v1324, 1056980736
        %v1433 = vmul.bf16 %v1325, 1056980736
        %v1434 = vmul.bf16 %v1326, 1056980736
        %v1435 = vmul.bf16 %v1327, 1056980736
        %v1436 = vtanh.bf16.pop %v1328
        %v1437 = vtanh.bf16.pop %v1329
        %v1438 = vtanh.bf16.pop %v1330
        %v1439 = vtanh.bf16.pop %v1331
        %v1440 = vtanh.bf16.pop %v1332
        %v1441 = vtanh.bf16.pop %v1333
        %v1442 = vtanh.bf16.pop %v1334
        %v1443 = vtanh.bf16.pop %v1335
        %v1444 = vtanh.bf16.pop %v1336
        %v1445 = vtanh.bf16.pop %v1337
        %v1446 = vtanh.bf16.pop %v1338
        %v1447 = vtanh.bf16.pop %v1339
        %v1448 = vtanh.bf16.pop %v1340
        %v1449 = vtanh.bf16.pop %v1341
        %v1450 = vtanh.bf16.pop %v1342
        %v1451 = vtanh.bf16.pop %v1343
        %v1452 = vtanh.bf16.pop %v1344
        %v1453 = vtanh.bf16.pop %v1345
        %v1454 = vtanh.bf16.pop %v1346
        %v1455 = vtanh.bf16.pop %v1347
        %v1456 = vtanh.bf16.pop %v1348
        %v1457 = vtanh.bf16.pop %v1349
        %v1458 = vtanh.bf16.pop %v1350
        %v1459 = vtanh.bf16.pop %v1351
        %v1460 = vtanh.bf16.pop %v1352
        %v1461 = vtanh.bf16.pop %v1353
        %v1462 = vtanh.bf16.pop %v1354
        %v1463 = vtanh.bf16.pop %v1355
        %v1464 = vtanh.bf16.pop %v1356
        %v1465 = vtanh.bf16.pop %v1357
        %v1466 = vtanh.bf16.pop %v1358
        %v1467 = vtanh.bf16.pop %v1359
        %v1468 = vtanh.bf16.pop %v1360
        %v1469 = vtanh.bf16.pop %v1361
        %v1470 = vtanh.bf16.pop %v1362
        %v1471 = vtanh.bf16.pop %v1363
        %v1472 = vtanh.bf16.pop %v1364
        %v1473 = vtanh.bf16.pop %v1365
        %v1474 = vtanh.bf16.pop %v1366
        %v1475 = vtanh.bf16.pop %v1367
        %v1476 = vtanh.bf16.pop %v1368
        %v1477 = vtanh.bf16.pop %v1369
        %v1478 = vtanh.bf16.pop %v1370
        %v1479 = vtanh.bf16.pop %v1371
        %v1480 = vtanh.bf16.pop %v1372
        %v1481 = vtanh.bf16.pop %v1373
        %v1482 = vtanh.bf16.pop %v1374
        %v1483 = vtanh.bf16.pop %v1375
        %v1484 = vtanh.bf16.pop %v1376
        %v1485 = vtanh.bf16.pop %v1377
        %v1486 = vtanh.bf16.pop %v1378
        %v1487 = vtanh.bf16.pop %v1379
        %v1488 = vtanh.bf16.pop %v1380
        %v1489 = vtanh.bf16.pop %v1381
        %v1490 = vtanh.bf16.pop %v1382
        %v1491 = vtanh.bf16.pop %v1383
        %v1492 = vtanh.bf16.pop %v1384
        %v1493 = vtanh.bf16.pop %v1385
        %v1494 = vtanh.bf16.pop %v1386
        %v1495 = vtanh.bf16.pop %v1387
        %v1496 = vtanh.bf16.pop %v1388
        %v1497 = vtanh.bf16.pop %v1389
        %v1498 = vtanh.bf16.pop %v1390
        %v1499 = vtanh.bf16.pop %v1391
        %v1500 = vtanh.bf16.pop %v1392
        %v1501 = vtanh.bf16.pop %v1393
        %v1502 = vtanh.bf16.pop %v1394
        %v1503 = vtanh.bf16.pop %v1395
        %v1504 = vtanh.bf16.pop %v1396
        %v1505 = vtanh.bf16.pop %v1397
        %v1506 = vtanh.bf16.pop %v1398
        %v1507 = vtanh.bf16.pop %v1399
        %v1508 = vtanh.bf16.pop %v1400
        %v1509 = vtanh.bf16.pop %v1401
        %v1510 = vtanh.bf16.pop %v1402
        %v1511 = vtanh.bf16.pop %v1403
        %v1512 = vtanh.bf16.pop %v1404
        %v1513 = vtanh.bf16.pop %v1405
        %v1514 = vtanh.bf16.pop %v1406
        %v1515 = vtanh.bf16.pop %v1407
        %v1516 = vtanh.bf16.pop %v1408
        %v1517 = vtanh.bf16.pop %v1409
        %v1518 = vtanh.bf16.pop %v1410
        %v1519 = vtanh.bf16.pop %v1411
        %v1520 = vtanh.bf16.pop %v1412
        %v1521 = vtanh.bf16.pop %v1413
        %v1522 = vtanh.bf16.pop %v1414
        %v1523 = vtanh.bf16.pop %v1415
        %v1524 = vtanh.bf16.pop %v1416
        %v1525 = vtanh.bf16.pop %v1417
        %v1526 = vtanh.bf16.pop %v1418
        %v1527 = vtanh.bf16.pop %v1419
        %v1528 = vtanh.bf16.pop %v1420
        %v1529 = vtanh.bf16.pop %v1421
        %v1530 = vtanh.bf16.pop %v1422
        %v1531 = vtanh.bf16.pop %v1423
        %v1532 = vtanh.bf16.pop %v1424
        %v1533 = vtanh.bf16.pop %v1425
        %v1534 = vtanh.bf16.pop %v1426
        %v1535 = vtanh.bf16.pop %v1427
        %v1536 = vtanh.bf16.pop %v1428
        %v1537 = vtanh.bf16.pop %v1429
        %v1538 = vtanh.bf16.pop %v1430
        %v1539 = vtanh.bf16.pop %v1431
        %v1540 = vtanh.bf16.pop %v1432
        %v1541 = vtanh.bf16.pop %v1433
        %v1542 = vtanh.bf16.pop %v1434
        %v1543 = vtanh.bf16.pop %v1435
        %v1544 = vmul.bf16 %v1436, 1056980736
        %v1545 = vmul.bf16 %v1437, 1056980736
        %v1546 = vmul.bf16 %v1438, 1056980736
        %v1547 = vmul.bf16 %v1439, 1056980736
        %v1548 = vmul.bf16 %v1440, 1056980736
        %v1549 = vmul.bf16 %v1441, 1056980736
        %v1550 = vmul.bf16 %v1442, 1056980736
        %v1551 = vmul.bf16 %v1443, 1056980736
        %v1552 = vmul.bf16 %v1444, 1056980736
        %v1553 = vmul.bf16 %v1445, 1056980736
        %v1554 = vmul.bf16 %v1446, 1056980736
        %v1555 = vmul.bf16 %v1447, 1056980736
        %v1556 = vmul.bf16 %v1448, 1056980736
        %v1557 = vmul.bf16 %v1449, 1056980736
        %v1558 = vmul.bf16 %v1450, 1056980736
        %v1559 = vmul.bf16 %v1451, 1056980736
        %v1560 = vmul.bf16 %v1452, 1056980736
        %v1561 = vmul.bf16 %v1453, 1056980736
        %v1562 = vmul.bf16 %v1454, 1056980736
        %v1563 = vmul.bf16 %v1455, 1056980736
        %v1564 = vmul.bf16 %v1456, 1056980736
        %v1565 = vmul.bf16 %v1457, 1056980736
        %v1566 = vmul.bf16 %v1458, 1056980736
        %v1567 = vmul.bf16 %v1459, 1056980736
        %v1568 = vmul.bf16 %v1460, 1056980736
        %v1569 = vmul.bf16 %v1461, 1056980736
        %v1570 = vmul.bf16 %v1462, 1056980736
        %v1571 = vmul.bf16 %v1463, 1056980736
        %v1572 = vmul.bf16 %v1464, 1056980736
        %v1573 = vmul.bf16 %v1465, 1056980736
        %v1574 = vmul.bf16 %v1466, 1056980736
        %v1575 = vmul.bf16 %v1467, 1056980736
        %v1576 = vmul.bf16 %v1468, 1056980736
        %v1577 = vmul.bf16 %v1469, 1056980736
        %v1578 = vmul.bf16 %v1470, 1056980736
        %v1579 = vmul.bf16 %v1471, 1056980736
        %v1580 = vmul.bf16 %v1472, 1056980736
        %v1581 = vmul.bf16 %v1473, 1056980736
        %v1582 = vmul.bf16 %v1474, 1056980736
        %v1583 = vmul.bf16 %v1475, 1056980736
        %v1584 = vmul.bf16 %v1476, 1056980736
        %v1585 = vmul.bf16 %v1477, 1056980736
        %v1586 = vmul.bf16 %v1478, 1056980736
        %v1587 = vmul.bf16 %v1479, 1056980736
        %v1588 = vmul.bf16 %v1480, 1056980736
        %v1589 = vmul.bf16 %v1481, 1056980736
        %v1590 = vmul.bf16 %v1482, 1056980736
        %v1591 = vmul.bf16 %v1483, 1056980736
        %v1592 = vmul.bf16 %v1484, 1056980736
        %v1593 = vmul.bf16 %v1485, 1056980736
        %v1594 = vmul.bf16 %v1486, 1056980736
        %v1595 = vmul.bf16 %v1487, 1056980736
        %v1596 = vmul.bf16 %v1488, 1056980736
        %v1597 = vmul.bf16 %v1489, 1056980736
        %v1598 = vmul.bf16 %v1490, 1056980736
        %v1599 = vmul.bf16 %v1491, 1056980736
        %v1600 = vmul.bf16 %v1492, 1056980736
        %v1601 = vmul.bf16 %v1493, 1056980736
        %v1602 = vmul.bf16 %v1494, 1056980736
        %v1603 = vmul.bf16 %v1495, 1056980736
        %v1604 = vmul.bf16 %v1496, 1056980736
        %v1605 = vmul.bf16 %v1497, 1056980736
        %v1606 = vmul.bf16 %v1498, 1056980736
        %v1607 = vmul.bf16 %v1499, 1056980736
        %v1608 = vmul.bf16 %v1500, 1056980736
        %v1609 = vmul.bf16 %v1501, 1056980736
        %v1610 = vmul.bf16 %v1502, 1056980736
        %v1611 = vmul.bf16 %v1503, 1056980736
        %v1612 = vmul.bf16 %v1504, 1056980736
        %v1613 = vmul.bf16 %v1505, 1056980736
        %v1614 = vmul.bf16 %v1506, 1056980736
        %v1615 = vmul.bf16 %v1507, 1056980736
        %v1616 = vmul.bf16 %v1508, 1056980736
        %v1617 = vmul.bf16 %v1509, 1056980736
        %v1618 = vmul.bf16 %v1510, 1056980736
        %v1619 = vmul.bf16 %v1511, 1056980736
        %v1620 = vmul.bf16 %v1512, 1056980736
        %v1621 = vmul.bf16 %v1513, 1056980736
        %v1622 = vmul.bf16 %v1514, 1056980736
        %v1623 = vmul.bf16 %v1515, 1056980736
        %v1624 = vmul.bf16 %v1516, 1056980736
        %v1625 = vmul.bf16 %v1517, 1056980736
        %v1626 = vmul.bf16 %v1518, 1056980736
        %v1627 = vmul.bf16 %v1519, 1056980736
        %v1628 = vmul.bf16 %v1520, 1056980736
        %v1629 = vmul.bf16 %v1521, 1056980736
        %v1630 = vmul.bf16 %v1522, 1056980736
        %v1631 = vmul.bf16 %v1523, 1056980736
        %v1632 = vmul.bf16 %v1524, 1056980736
        %v1633 = vmul.bf16 %v1525, 1056980736
        %v1634 = vmul.bf16 %v1526, 1056980736
        %v1635 = vmul.bf16 %v1527, 1056980736
        %v1636 = vmul.bf16 %v1528, 1056980736
        %v1637 = vmul.bf16 %v1529, 1056980736
        %v1638 = vmul.bf16 %v1530, 1056980736
        %v1639 = vmul.bf16 %v1531, 1056980736
        %v1640 = vmul.bf16 %v1532, 1056980736
        %v1641 = vmul.bf16 %v1533, 1056980736
        %v1642 = vmul.bf16 %v1534, 1056980736
        %v1643 = vmul.bf16 %v1535, 1056980736
        %v1644 = vmul.bf16 %v1536, 1056980736
        %v1645 = vmul.bf16 %v1537, 1056980736
        %v1646 = vmul.bf16 %v1538, 1056980736
        %v1647 = vmul.bf16 %v1539, 1056980736
        %v1648 = vmul.bf16 %v1540, 1056980736
        %v1649 = vmul.bf16 %v1541, 1056980736
        %v1650 = vmul.bf16 %v1542, 1056980736
        %v1651 = vmul.bf16 %v1543, 1056980736
        %v1652 = vadd.bf16 %v1544, 1056980736
        %v1653 = vadd.bf16 %v1545, 1056980736
        %v1654 = vadd.bf16 %v1546, 1056980736
        %v1655 = vadd.bf16 %v1547, 1056980736
        %v1656 = vadd.bf16 %v1548, 1056980736
        %v1657 = vadd.bf16 %v1549, 1056980736
        %v1658 = vadd.bf16 %v1550, 1056980736
        %v1659 = vadd.bf16 %v1551, 1056980736
        %v1660 = vadd.bf16 %v1552, 1056980736
        %v1661 = vadd.bf16 %v1553, 1056980736
        %v1662 = vadd.bf16 %v1554, 1056980736
        %v1663 = vadd.bf16 %v1555, 1056980736
        %v1664 = vadd.bf16 %v1556, 1056980736
        %v1665 = vadd.bf16 %v1557, 1056980736
        %v1666 = vadd.bf16 %v1558, 1056980736
        %v1667 = vadd.bf16 %v1559, 1056980736
        %v1668 = vadd.bf16 %v1560, 1056980736
        %v1669 = vadd.bf16 %v1561, 1056980736
        %v1670 = vadd.bf16 %v1562, 1056980736
        %v1671 = vadd.bf16 %v1563, 1056980736
        %v1672 = vadd.bf16 %v1564, 1056980736
        %v1673 = vadd.bf16 %v1565, 1056980736
        %v1674 = vadd.bf16 %v1566, 1056980736
        %v1675 = vadd.bf16 %v1567, 1056980736
        %v1676 = vadd.bf16 %v1568, 1056980736
        %v1677 = vadd.bf16 %v1569, 1056980736
        %v1678 = vadd.bf16 %v1570, 1056980736
        %v1679 = vadd.bf16 %v1571, 1056980736
        %v1680 = vadd.bf16 %v1572, 1056980736
        %v1681 = vadd.bf16 %v1573, 1056980736
        %v1682 = vadd.bf16 %v1574, 1056980736
        %v1683 = vadd.bf16 %v1575, 1056980736
        %v1684 = vadd.bf16 %v1576, 1056980736
        %v1685 = vadd.bf16 %v1577, 1056980736
        %v1686 = vadd.bf16 %v1578, 1056980736
        %v1687 = vadd.bf16 %v1579, 1056980736
        %v1688 = vadd.bf16 %v1580, 1056980736
        %v1689 = vadd.bf16 %v1581, 1056980736
        %v1690 = vadd.bf16 %v1582, 1056980736
        %v1691 = vadd.bf16 %v1583, 1056980736
        %v1692 = vadd.bf16 %v1584, 1056980736
        %v1693 = vadd.bf16 %v1585, 1056980736
        %v1694 = vadd.bf16 %v1586, 1056980736
        %v1695 = vadd.bf16 %v1587, 1056980736
        %v1696 = vadd.bf16 %v1588, 1056980736
        %v1697 = vadd.bf16 %v1589, 1056980736
        %v1698 = vadd.bf16 %v1590, 1056980736
        %v1699 = vadd.bf16 %v1591, 1056980736
        %v1700 = vadd.bf16 %v1592, 1056980736
        %v1701 = vadd.bf16 %v1593, 1056980736
        %v1702 = vadd.bf16 %v1594, 1056980736
        %v1703 = vadd.bf16 %v1595, 1056980736
        %v1704 = vadd.bf16 %v1596, 1056980736
        %v1705 = vadd.bf16 %v1597, 1056980736
        %v1706 = vadd.bf16 %v1598, 1056980736
        %v1707 = vadd.bf16 %v1599, 1056980736
        %v1708 = vadd.bf16 %v1600, 1056980736
        %v1709 = vadd.bf16 %v1601, 1056980736
        %v1710 = vadd.bf16 %v1602, 1056980736
        %v1711 = vadd.bf16 %v1603, 1056980736
        %v1712 = vadd.bf16 %v1604, 1056980736
        %v1713 = vadd.bf16 %v1605, 1056980736
        %v1714 = vadd.bf16 %v1606, 1056980736
        %v1715 = vadd.bf16 %v1607, 1056980736
        %v1716 = vadd.bf16 %v1608, 1056980736
        %v1717 = vadd.bf16 %v1609, 1056980736
        %v1718 = vadd.bf16 %v1610, 1056980736
        %v1719 = vadd.bf16 %v1611, 1056980736
        %v1720 = vadd.bf16 %v1612, 1056980736
        %v1721 = vadd.bf16 %v1613, 1056980736
        %v1722 = vadd.bf16 %v1614, 1056980736
        %v1723 = vadd.bf16 %v1615, 1056980736
        %v1724 = vadd.bf16 %v1616, 1056980736
        %v1725 = vadd.bf16 %v1617, 1056980736
        %v1726 = vadd.bf16 %v1618, 1056980736
        %v1727 = vadd.bf16 %v1619, 1056980736
        %v1728 = vadd.bf16 %v1620, 1056980736
        %v1729 = vadd.bf16 %v1621, 1056980736
        %v1730 = vadd.bf16 %v1622, 1056980736
        %v1731 = vadd.bf16 %v1623, 1056980736
        %v1732 = vadd.bf16 %v1624, 1056980736
        %v1733 = vadd.bf16 %v1625, 1056980736
        %v1734 = vadd.bf16 %v1626, 1056980736
        %v1735 = vadd.bf16 %v1627, 1056980736
        %v1736 = vadd.bf16 %v1628, 1056980736
        %v1737 = vadd.bf16 %v1629, 1056980736
        %v1738 = vadd.bf16 %v1630, 1056980736
        %v1739 = vadd.bf16 %v1631, 1056980736
        %v1740 = vadd.bf16 %v1632, 1056980736
        %v1741 = vadd.bf16 %v1633, 1056980736
        %v1742 = vadd.bf16 %v1634, 1056980736
        %v1743 = vadd.bf16 %v1635, 1056980736
        %v1744 = vadd.bf16 %v1636, 1056980736
        %v1745 = vadd.bf16 %v1637, 1056980736
        %v1746 = vadd.bf16 %v1638, 1056980736
        %v1747 = vadd.bf16 %v1639, 1056980736
        %v1748 = vadd.bf16 %v1640, 1056980736
        %v1749 = vadd.bf16 %v1641, 1056980736
        %v1750 = vadd.bf16 %v1642, 1056980736
        %v1751 = vadd.bf16 %v1643, 1056980736
        %v1752 = vadd.bf16 %v1644, 1056980736
        %v1753 = vadd.bf16 %v1645, 1056980736
        %v1754 = vadd.bf16 %v1646, 1056980736
        %v1755 = vadd.bf16 %v1647, 1056980736
        %v1756 = vadd.bf16 %v1648, 1056980736
        %v1757 = vadd.bf16 %v1649, 1056980736
        %v1758 = vadd.bf16 %v1650, 1056980736
        %v1759 = vadd.bf16 %v1651, 1056980736
        %v1760 = vmul.bf16 %v1220, %v1652
        %v1761 = vmul.bf16 %v1221, %v1653
        %v1762 = vmul.bf16 %v1222, %v1654
        %v1763 = vmul.bf16 %v1223, %v1655
        %v1764 = vmul.bf16 %v1224, %v1656
        %v1765 = vmul.bf16 %v1225, %v1657
        %v1766 = vmul.bf16 %v1226, %v1658
        %v1767 = vmul.bf16 %v1227, %v1659
        %v1768 = vmul.bf16 %v1228, %v1660
        %v1769 = vmul.bf16 %v1229, %v1661
        %v1770 = vmul.bf16 %v1230, %v1662
        %v1771 = vmul.bf16 %v1231, %v1663
        %v1772 = vmul.bf16 %v1232, %v1664
        %v1773 = vmul.bf16 %v1233, %v1665
        %v1774 = vmul.bf16 %v1234, %v1666
        %v1775 = vmul.bf16 %v1235, %v1667
        %v1776 = vmul.bf16 %v1236, %v1668
        %v1777 = vmul.bf16 %v1237, %v1669
        %v1778 = vmul.bf16 %v1238, %v1670
        %v1779 = vmul.bf16 %v1239, %v1671
        %v1780 = vmul.bf16 %v1240, %v1672
        %v1781 = vmul.bf16 %v1241, %v1673
        %v1782 = vmul.bf16 %v1242, %v1674
        %v1783 = vmul.bf16 %v1243, %v1675
        %v1784 = vmul.bf16 %v1244, %v1676
        %v1785 = vmul.bf16 %v1245, %v1677
        %v1786 = vmul.bf16 %v1246, %v1678
        %v1787 = vmul.bf16 %v1247, %v1679
        %v1788 = vmul.bf16 %v1248, %v1680
        %v1789 = vmul.bf16 %v1249, %v1681
        %v1790 = vmul.bf16 %v1250, %v1682
        %v1791 = vmul.bf16 %v1251, %v1683
        %v1792 = vmul.bf16 %v1252, %v1684
        %v1793 = vmul.bf16 %v1253, %v1685
        %v1794 = vmul.bf16 %v1254, %v1686
        %v1795 = vmul.bf16 %v1255, %v1687
        %v1796 = vmul.bf16 %v1256, %v1688
        %v1797 = vmul.bf16 %v1257, %v1689
        %v1798 = vmul.bf16 %v1258, %v1690
        %v1799 = vmul.bf16 %v1259, %v1691
        %v1800 = vmul.bf16 %v1260, %v1692
        %v1801 = vmul.bf16 %v1261, %v1693
        %v1802 = vmul.bf16 %v1262, %v1694
        %v1803 = vmul.bf16 %v1263, %v1695
        %v1804 = vmul.bf16 %v1264, %v1696
        %v1805 = vmul.bf16 %v1265, %v1697
        %v1806 = vmul.bf16 %v1266, %v1698
        %v1807 = vmul.bf16 %v1267, %v1699
        %v1808 = vmul.bf16 %v1268, %v1700
        %v1809 = vmul.bf16 %v1269, %v1701
        %v1810 = vmul.bf16 %v1270, %v1702
        %v1811 = vmul.bf16 %v1271, %v1703
        %v1812 = vmul.bf16 %v1272, %v1704
        %v1813 = vmul.bf16 %v1273, %v1705
        %v1814 = vmul.bf16 %v1274, %v1706
        %v1815 = vmul.bf16 %v1275, %v1707
        %v1816 = vmul.bf16 %v1276, %v1708
        %v1817 = vmul.bf16 %v1277, %v1709
        %v1818 = vmul.bf16 %v1278, %v1710
        %v1819 = vmul.bf16 %v1279, %v1711
        %v1820 = vmul.bf16 %v1280, %v1712
        %v1821 = vmul.bf16 %v1281, %v1713
        %v1822 = vmul.bf16 %v1282, %v1714
        %v1823 = vmul.bf16 %v1283, %v1715
        %v1824 = vmul.bf16 %v1284, %v1716
        %v1825 = vmul.bf16 %v1285, %v1717
        %v1826 = vmul.bf16 %v1286, %v1718
        %v1827 = vmul.bf16 %v1287, %v1719
        %v1828 = vmul.bf16 %v1288, %v1720
        %v1829 = vmul.bf16 %v1289, %v1721
        %v1830 = vmul.bf16 %v1290, %v1722
        %v1831 = vmul.bf16 %v1291, %v1723
        %v1832 = vmul.bf16 %v1292, %v1724
        %v1833 = vmul.bf16 %v1293, %v1725
        %v1834 = vmul.bf16 %v1294, %v1726
        %v1835 = vmul.bf16 %v1295, %v1727
        %v1836 = vmul.bf16 %v1296, %v1728
        %v1837 = vmul.bf16 %v1297, %v1729
        %v1838 = vmul.bf16 %v1298, %v1730
        %v1839 = vmul.bf16 %v1299, %v1731
        %v1840 = vmul.bf16 %v1300, %v1732
        %v1841 = vmul.bf16 %v1301, %v1733
        %v1842 = vmul.bf16 %v1302, %v1734
        %v1843 = vmul.bf16 %v1303, %v1735
        %v1844 = vmul.bf16 %v1304, %v1736
        %v1845 = vmul.bf16 %v1305, %v1737
        %v1846 = vmul.bf16 %v1306, %v1738
        %v1847 = vmul.bf16 %v1307, %v1739
        %v1848 = vmul.bf16 %v1308, %v1740
        %v1849 = vmul.bf16 %v1309, %v1741
        %v1850 = vmul.bf16 %v1310, %v1742
        %v1851 = vmul.bf16 %v1311, %v1743
        %v1852 = vmul.bf16 %v1312, %v1744
        %v1853 = vmul.bf16 %v1313, %v1745
        %v1854 = vmul.bf16 %v1314, %v1746
        %v1855 = vmul.bf16 %v1315, %v1747
        %v1856 = vmul.bf16 %v1316, %v1748
        %v1857 = vmul.bf16 %v1317, %v1749
        %v1858 = vmul.bf16 %v1318, %v1750
        %v1859 = vmul.bf16 %v1319, %v1751
        %v1860 = vmul.bf16 %v1320, %v1752
        %v1861 = vmul.bf16 %v1321, %v1753
        %v1862 = vmul.bf16 %v1322, %v1754
        %v1863 = vmul.bf16 %v1323, %v1755
        %v1864 = vmul.bf16 %v1324, %v1756
        %v1865 = vmul.bf16 %v1325, %v1757
        %v1866 = vmul.bf16 %v1326, %v1758
        %v1867 = vmul.bf16 %v1327, %v1759
        %v1868 = vld [vmem:[%s3] sm:$0xff]
        %v1869 = vld [vmem:[%s3 + $0x8] sm:$0x11]
        %v1870 = vld [vmem:[%s4] sm:$0xff]
        %v1871 = vld [vmem:[%s4 + $0x8] sm:$0x1]
        %1873 = vset.pattern.permute.xlu0 0
        %1874 = vperm.xlu0 %1873, %v1870
        %v1875 = vpop.permute.xlu0 %1874
        %1878 = vset.pattern.permute.xlu0 0
        %1879 = vperm.xlu0 %1878, %v1871
        %v1880 = vpop.permute.xlu0 %1879
        %v1884 = vunpack.c.l.b16 %v1868
        %v1885 = vunpack.c.h.b16 %v1868
        %v1886 = vunpack.c.l.b16 %v1869
        %v1887 = vunpack.c.h.b16 %v1869
        %v1888 = vpack.c.b16 %v1886, %v1884
        %v1889 = vpack.c.b16 %v1887, %v1885
        %v1999 = vunpack.c.l.b16 %v1760
        %v2000 = vunpack.c.h.b16 %v1760
        %v2001 = vunpack.c.l.b16 %v1761
        %v2002 = vunpack.c.h.b16 %v1761
        %v2003 = vunpack.c.l.b16 %v1762
        %v2004 = vunpack.c.h.b16 %v1762
        %v2005 = vunpack.c.l.b16 %v1763
        %v2006 = vunpack.c.h.b16 %v1763
        %v2007 = vunpack.c.l.b16 %v1764
        %v2008 = vunpack.c.h.b16 %v1764
        %v2009 = vunpack.c.l.b16 %v1765
        %v2010 = vunpack.c.h.b16 %v1765
        %v2011 = vunpack.c.l.b16 %v1766
        %v2012 = vunpack.c.h.b16 %v1766
        %v2013 = vunpack.c.l.b16 %v1767
        %v2014 = vunpack.c.h.b16 %v1767
        %v2015 = vunpack.c.l.b16 %v1768
        %v2016 = vunpack.c.h.b16 %v1768
        %v2017 = vunpack.c.l.b16 %v1769
        %v2018 = vunpack.c.h.b16 %v1769
        %v2019 = vunpack.c.l.b16 %v1770
        %v2020 = vunpack.c.h.b16 %v1770
        %v2021 = vunpack.c.l.b16 %v1771
        %v2022 = vunpack.c.h.b16 %v1771
        %v2023 = vunpack.c.l.b16 %v1772
        %v2024 = vunpack.c.h.b16 %v1772
        %v2025 = vunpack.c.l.b16 %v1773
        %v2026 = vunpack.c.h.b16 %v1773
        %v2027 = vunpack.c.l.b16 %v1774
        %v2028 = vunpack.c.h.b16 %v1774
        %v2029 = vunpack.c.l.b16 %v1775
        %v2030 = vunpack.c.h.b16 %v1775
        %v2031 = vunpack.c.l.b16 %v1776
        %v2032 = vunpack.c.h.b16 %v1776
        %v2033 = vunpack.c.l.b16 %v1777
        %v2034 = vunpack.c.h.b16 %v1777
        %v2035 = vunpack.c.l.b16 %v1778
        %v2036 = vunpack.c.h.b16 %v1778
        %v2037 = vunpack.c.l.b16 %v1779
        %v2038 = vunpack.c.h.b16 %v1779
        %v2039 = vunpack.c.l.b16 %v1780
        %v2040 = vunpack.c.h.b16 %v1780
        %v2041 = vunpack.c.l.b16 %v1781
        %v2042 = vunpack.c.h.b16 %v1781
        %v2043 = vunpack.c.l.b16 %v1782
        %v2044 = vunpack.c.h.b16 %v1782
        %v2045 = vunpack.c.l.b16 %v1783
        %v2046 = vunpack.c.h.b16 %v1783
        %v2047 = vunpack.c.l.b16 %v1784
        %v2048 = vunpack.c.h.b16 %v1784
        %v2049 = vunpack.c.l.b16 %v1785
        %v2050 = vunpack.c.h.b16 %v1785
        %v2051 = vunpack.c.l.b16 %v1786
        %v2052 = vunpack.c.h.b16 %v1786
        %v2053 = vunpack.c.l.b16 %v1787
        %v2054 = vunpack.c.h.b16 %v1787
        %v2055 = vunpack.c.l.b16 %v1788
        %v2056 = vunpack.c.h.b16 %v1788
        %v2057 = vunpack.c.l.b16 %v1789
        %v2058 = vunpack.c.h.b16 %v1789
        %v2059 = vunpack.c.l.b16 %v1790
        %v2060 = vunpack.c.h.b16 %v1790
        %v2061 = vunpack.c.l.b16 %v1791
        %v2062 = vunpack.c.h.b16 %v1791
        %v2063 = vunpack.c.l.b16 %v1792
        %v2064 = vunpack.c.h.b16 %v1792
        %v2065 = vunpack.c.l.b16 %v1793
        %v2066 = vunpack.c.h.b16 %v1793
        %v2067 = vunpack.c.l.b16 %v1794
        %v2068 = vunpack.c.h.b16 %v1794
        %v2069 = vunpack.c.l.b16 %v1795
        %v2070 = vunpack.c.h.b16 %v1795
        %v2071 = vunpack.c.l.b16 %v1796
        %v2072 = vunpack.c.h.b16 %v1796
        %v2073 = vunpack.c.l.b16 %v1797
        %v2074 = vunpack.c.h.b16 %v1797
        %v2075 = vunpack.c.l.b16 %v1798
        %v2076 = vunpack.c.h.b16 %v1798
        %v2077 = vunpack.c.l.b16 %v1799
        %v2078 = vunpack.c.h.b16 %v1799
        %v2079 = vunpack.c.l.b16 %v1800
        %v2080 = vunpack.c.h.b16 %v1800
        %v2081 = vunpack.c.l.b16 %v1801
        %v2082 = vunpack.c.h.b16 %v1801
        %v2083 = vunpack.c.l.b16 %v1802
        %v2084 = vunpack.c.h.b16 %v1802
        %v2085 = vunpack.c.l.b16 %v1803
        %v2086 = vunpack.c.h.b16 %v1803
        %v2087 = vunpack.c.l.b16 %v1804
        %v2088 = vunpack.c.h.b16 %v1804
        %v2089 = vunpack.c.l.b16 %v1805
        %v2090 = vunpack.c.h.b16 %v1805
        %v2091 = vunpack.c.l.b16 %v1806
        %v2092 = vunpack.c.h.b16 %v1806
        %v2093 = vunpack.c.l.b16 %v1807
        %v2094 = vunpack.c.h.b16 %v1807
        %v2095 = vunpack.c.l.b16 %v1808
        %v2096 = vunpack.c.h.b16 %v1808
        %v2097 = vunpack.c.l.b16 %v1809
        %v2098 = vunpack.c.h.b16 %v1809
        %v2099 = vunpack.c.l.b16 %v1810
        %v2100 = vunpack.c.h.b16 %v1810
        %v2101 = vunpack.c.l.b16 %v1811
        %v2102 = vunpack.c.h.b16 %v1811
        %v2103 = vunpack.c.l.b16 %v1812
        %v2104 = vunpack.c.h.b16 %v1812
        %v2105 = vunpack.c.l.b16 %v1813
        %v2106 = vunpack.c.h.b16 %v1813
        %v2107 = vunpack.c.l.b16 %v1814
        %v2108 = vunpack.c.h.b16 %v1814
        %v2109 = vunpack.c.l.b16 %v1815
        %v2110 = vunpack.c.h.b16 %v1815
        %v2111 = vunpack.c.l.b16 %v1816
        %v2112 = vunpack.c.h.b16 %v1816
        %v2113 = vunpack.c.l.b16 %v1817
        %v2114 = vunpack.c.h.b16 %v1817
        %v2115 = vunpack.c.l.b16 %v1818
        %v2116 = vunpack.c.h.b16 %v1818
        %v2117 = vunpack.c.l.b16 %v1819
        %v2118 = vunpack.c.h.b16 %v1819
        %v2119 = vunpack.c.l.b16 %v1820
        %v2120 = vunpack.c.h.b16 %v1820
        %v2121 = vunpack.c.l.b16 %v1821
        %v2122 = vunpack.c.h.b16 %v1821
        %v2123 = vunpack.c.l.b16 %v1822
        %v2124 = vunpack.c.h.b16 %v1822
        %v2125 = vunpack.c.l.b16 %v1823
        %v2126 = vunpack.c.h.b16 %v1823
        %v2127 = vunpack.c.l.b16 %v1824
        %v2128 = vunpack.c.h.b16 %v1824
        %v2129 = vunpack.c.l.b16 %v1825
        %v2130 = vunpack.c.h.b16 %v1825
        %v2131 = vunpack.c.l.b16 %v1826
        %v2132 = vunpack.c.h.b16 %v1826
        %v2133 = vunpack.c.l.b16 %v1827
        %v2134 = vunpack.c.h.b16 %v1827
        %v2135 = vunpack.c.l.b16 %v1828
        %v2136 = vunpack.c.h.b16 %v1828
        %v2137 = vunpack.c.l.b16 %v1829
        %v2138 = vunpack.c.h.b16 %v1829
        %v2139 = vunpack.c.l.b16 %v1830
        %v2140 = vunpack.c.h.b16 %v1830
        %v2141 = vunpack.c.l.b16 %v1831
        %v2142 = vunpack.c.h.b16 %v1831
        %v2143 = vunpack.c.l.b16 %v1832
        %v2144 = vunpack.c.h.b16 %v1832
        %v2145 = vunpack.c.l.b16 %v1833
        %v2146 = vunpack.c.h.b16 %v1833
        %v2147 = vunpack.c.l.b16 %v1834
        %v2148 = vunpack.c.h.b16 %v1834
        %v2149 = vunpack.c.l.b16 %v1835
        %v2150 = vunpack.c.h.b16 %v1835
        %v2151 = vunpack.c.l.b16 %v1836
        %v2152 = vunpack.c.h.b16 %v1836
        %v2153 = vunpack.c.l.b16 %v1837
        %v2154 = vunpack.c.h.b16 %v1837
        %v2155 = vunpack.c.l.b16 %v1838
        %v2156 = vunpack.c.h.b16 %v1838
        %v2157 = vunpack.c.l.b16 %v1839
        %v2158 = vunpack.c.h.b16 %v1839
        %v2159 = vunpack.c.l.b16 %v1840
        %v2160 = vunpack.c.h.b16 %v1840
        %v2161 = vunpack.c.l.b16 %v1841
        %v2162 = vunpack.c.h.b16 %v1841
        %v2163 = vunpack.c.l.b16 %v1842
        %v2164 = vunpack.c.h.b16 %v1842
        %v2165 = vunpack.c.l.b16 %v1843
        %v2166 = vunpack.c.h.b16 %v1843
        %v2167 = vunpack.c.l.b16 %v1844
        %v2168 = vunpack.c.h.b16 %v1844
        %v2169 = vunpack.c.l.b16 %v1845
        %v2170 = vunpack.c.h.b16 %v1845
        %v2171 = vunpack.c.l.b16 %v1846
        %v2172 = vunpack.c.h.b16 %v1846
        %v2173 = vunpack.c.l.b16 %v1847
        %v2174 = vunpack.c.h.b16 %v1847
        %v2175 = vunpack.c.l.b16 %v1848
        %v2176 = vunpack.c.h.b16 %v1848
        %v2177 = vunpack.c.l.b16 %v1849
        %v2178 = vunpack.c.h.b16 %v1849
        %v2179 = vunpack.c.l.b16 %v1850
        %v2180 = vunpack.c.h.b16 %v1850
        %v2181 = vunpack.c.l.b16 %v1851
        %v2182 = vunpack.c.h.b16 %v1851
        %v2183 = vunpack.c.l.b16 %v1852
        %v2184 = vunpack.c.h.b16 %v1852
        %v2185 = vunpack.c.l.b16 %v1853
        %v2186 = vunpack.c.h.b16 %v1853
        %v2187 = vunpack.c.l.b16 %v1854
        %v2188 = vunpack.c.h.b16 %v1854
        %v2189 = vunpack.c.l.b16 %v1855
        %v2190 = vunpack.c.h.b16 %v1855
        %v2191 = vunpack.c.l.b16 %v1856
        %v2192 = vunpack.c.h.b16 %v1856
        %v2193 = vunpack.c.l.b16 %v1857
        %v2194 = vunpack.c.h.b16 %v1857
        %v2195 = vunpack.c.l.b16 %v1858
        %v2196 = vunpack.c.h.b16 %v1858
        %v2197 = vunpack.c.l.b16 %v1859
        %v2198 = vunpack.c.h.b16 %v1859
        %v2199 = vunpack.c.l.b16 %v1860
        %v2200 = vunpack.c.h.b16 %v1860
        %v2201 = vunpack.c.l.b16 %v1861
        %v2202 = vunpack.c.h.b16 %v1861
        %v2203 = vunpack.c.l.b16 %v1862
        %v2204 = vunpack.c.h.b16 %v1862
        %v2205 = vunpack.c.l.b16 %v1863
        %v2206 = vunpack.c.h.b16 %v1863
        %v2207 = vunpack.c.l.b16 %v1864
        %v2208 = vunpack.c.h.b16 %v1864
        %v2209 = vunpack.c.l.b16 %v1865
        %v2210 = vunpack.c.h.b16 %v1865
        %v2211 = vunpack.c.l.b16 %v1866
        %v2212 = vunpack.c.h.b16 %v1866
        %v2213 = vunpack.c.l.b16 %v1867
        %v2214 = vunpack.c.h.b16 %v1867
        %v2215 = vpack.c.b16 %v2007, %v1999
        %v2216 = vpack.c.b16 %v2008, %v2000
        %v2217 = vpack.c.b16 %v2009, %v2001
        %v2218 = vpack.c.b16 %v2010, %v2002
        %v2219 = vpack.c.b16 %v2011, %v2003
        %v2220 = vpack.c.b16 %v2012, %v2004
        %v2221 = vpack.c.b16 %v2013, %v2005
        %v2222 = vpack.c.b16 %v2014, %v2006
        %v2223 = vpack.c.b16 %v2023, %v2015
        %v2224 = vpack.c.b16 %v2024, %v2016
        %v2225 = vpack.c.b16 %v2025, %v2017
        %v2226 = vpack.c.b16 %v2026, %v2018
        %v2227 = vpack.c.b16 %v2027, %v2019
        %v2228 = vpack.c.b16 %v2028, %v2020
        %v2229 = vpack.c.b16 %v2029, %v2021
        %v2230 = vpack.c.b16 %v2030, %v2022
        %v2231 = vpack.c.b16 %v2039, %v2031
        %v2232 = vpack.c.b16 %v2040, %v2032
        %v2233 = vpack.c.b16 %v2041, %v2033
        %v2234 = vpack.c.b16 %v2042, %v2034
        %v2235 = vpack.c.b16 %v2043, %v2035
        %v2236 = vpack.c.b16 %v2044, %v2036
        %v2237 = vpack.c.b16 %v2045, %v2037
        %v2238 = vpack.c.b16 %v2046, %v2038
        %v2239 = vpack.c.b16 %v2055, %v2047
        %v2240 = vpack.c.b16 %v2056, %v2048
        %v2241 = vpack.c.b16 %v2057, %v2049
        %v2242 = vpack.c.b16 %v2058, %v2050
        %v2243 = vpack.c.b16 %v2059, %v2051
        %v2244 = vpack.c.b16 %v2060, %v2052
        %v2245 = vpack.c.b16 %v2061, %v2053
        %v2246 = vpack.c.b16 %v2062, %v2054
        %v2247 = vpack.c.b16 %v2071, %v2063
        %v2248 = vpack.c.b16 %v2072, %v2064
        %v2249 = vpack.c.b16 %v2073, %v2065
        %v2250 = vpack.c.b16 %v2074, %v2066
        %v2251 = vpack.c.b16 %v2075, %v2067
        %v2252 = vpack.c.b16 %v2076, %v2068
        %v2253 = vpack.c.b16 %v2077, %v2069
        %v2254 = vpack.c.b16 %v2078, %v2070
        %v2255 = vpack.c.b16 %v2087, %v2079
        %v2256 = vpack.c.b16 %v2088, %v2080
        %v2257 = vpack.c.b16 %v2089, %v2081
        %v2258 = vpack.c.b16 %v2090, %v2082
        %v2259 = vpack.c.b16 %v2091, %v2083
        %v2260 = vpack.c.b16 %v2092, %v2084
        %v2261 = vpack.c.b16 %v2093, %v2085
        %v2262 = vpack.c.b16 %v2094, %v2086
        %v2263 = vpack.c.b16 %v2103, %v2095
        %v2264 = vpack.c.b16 %v2104, %v2096
        %v2265 = vpack.c.b16 %v2105, %v2097
        %v2266 = vpack.c.b16 %v2106, %v2098
        %v2267 = vpack.c.b16 %v2107, %v2099
        %v2268 = vpack.c.b16 %v2108, %v2100
        %v2269 = vpack.c.b16 %v2109, %v2101
        %v2270 = vpack.c.b16 %v2110, %v2102
        %v2271 = vpack.c.b16 %v2119, %v2111
        %v2272 = vpack.c.b16 %v2120, %v2112
        %v2273 = vpack.c.b16 %v2121, %v2113
        %v2274 = vpack.c.b16 %v2122, %v2114
        %v2275 = vpack.c.b16 %v2123, %v2115
        %v2276 = vpack.c.b16 %v2124, %v2116
        %v2277 = vpack.c.b16 %v2125, %v2117
        %v2278 = vpack.c.b16 %v2126, %v2118
        %v2279 = vpack.c.b16 %v2135, %v2127
        %v2280 = vpack.c.b16 %v2136, %v2128
        %v2281 = vpack.c.b16 %v2137, %v2129
        %v2282 = vpack.c.b16 %v2138, %v2130
        %v2283 = vpack.c.b16 %v2139, %v2131
        %v2284 = vpack.c.b16 %v2140, %v2132
        %v2285 = vpack.c.b16 %v2141, %v2133
        %v2286 = vpack.c.b16 %v2142, %v2134
        %v2287 = vpack.c.b16 %v2151, %v2143
        %v2288 = vpack.c.b16 %v2152, %v2144
        %v2289 = vpack.c.b16 %v2153, %v2145
        %v2290 = vpack.c.b16 %v2154, %v2146
        %v2291 = vpack.c.b16 %v2155, %v2147
        %v2292 = vpack.c.b16 %v2156, %v2148
        %v2293 = vpack.c.b16 %v2157, %v2149
        %v2294 = vpack.c.b16 %v2158, %v2150
        %v2295 = vpack.c.b16 %v2167, %v2159
        %v2296 = vpack.c.b16 %v2168, %v2160
        %v2297 = vpack.c.b16 %v2169, %v2161
        %v2298 = vpack.c.b16 %v2170, %v2162
        %v2299 = vpack.c.b16 %v2171, %v2163
        %v2300 = vpack.c.b16 %v2172, %v2164
        %v2301 = vpack.c.b16 %v2173, %v2165
        %v2302 = vpack.c.b16 %v2174, %v2166
        %v2303 = vpack.c.b16 %v2183, %v2175
        %v2304 = vpack.c.b16 %v2184, %v2176
        %v2305 = vpack.c.b16 %v2185, %v2177
        %v2306 = vpack.c.b16 %v2186, %v2178
        %v2307 = vpack.c.b16 %v2187, %v2179
        %v2308 = vpack.c.b16 %v2188, %v2180
        %v2309 = vpack.c.b16 %v2189, %v2181
        %v2310 = vpack.c.b16 %v2190, %v2182
        %v2311 = vpack.c.b16 %v2199, %v2191
        %v2312 = vpack.c.b16 %v2200, %v2192
        %v2313 = vpack.c.b16 %v2201, %v2193
        %v2314 = vpack.c.b16 %v2202, %v2194
        %v2315 = vpack.c.b16 %v2203, %v2195
        %v2316 = vpack.c.b16 %v2204, %v2196
        %v2317 = vpack.c.b16 %v2205, %v2197
        %v2318 = vpack.c.b16 %v2206, %v2198
        %v2319 = vpack.c.b16 %v2207, %v2207
        %v2320 = vpack.c.b16 %v2208, %v2208
        %v2321 = vpack.c.b16 %v2209, %v2209
        %v2322 = vpack.c.b16 %v2210, %v2210
        %v2323 = vpack.c.b16 %v2211, %v2211
        %v2324 = vpack.c.b16 %v2212, %v2212
        %v2325 = vpack.c.b16 %v2213, %v2213
        %v2326 = vpack.c.b16 %v2214, %v2214
        %vm2431 = vcmask 719872
        %v2433 = vsel %vm2431, %v1889, 0
        %vm2435 = vcmask 1043456
        %v2437 = vsel %vm2435, %v2319, 0
        %v2440 = vsel %vm2435, %v2320, 0
        %v2443 = vsel %vm2435, %v2321, 0
        %v2446 = vsel %vm2435, %v2322, 0
        %v2449 = vsel %vm2435, %v2323, 0
        %v2452 = vsel %vm2435, %v2324, 0
        %v2455 = vsel %vm2435, %v2325, 0
        %v2458 = vsel %vm2435, %v2326, 0
        %2460 = vmatprep.subr.bf16.mxu0 %v2272
        %2461 = vmatpush1.bf16.msra.mxu0 %v2271
        %2462 = vmatprep.subr.bf16.mxu0 %v2264
        %2463 = vmatpush1.bf16.msra.mxu0 %v2263
        %2464 = vmatprep.subr.bf16.mxu0 %v2256
        %2465 = vmatpush1.bf16.msra.mxu0 %v2255
        %2466 = vmatprep.subr.bf16.mxu0 %v2248
        %2467 = vmatpush1.bf16.msra.mxu0 %v2247
        %2468 = vmatprep.subr.bf16.mxu0 %v2240
        %2469 = vmatpush1.bf16.msra.mxu0 %v2239
        %2470 = vmatprep.subr.bf16.mxu0 %v2232
        %2471 = vmatpush1.bf16.msra.mxu0 %v2231
        %2472 = vmatprep.subr.bf16.mxu0 %v2224
        %2473 = vmatpush1.bf16.msra.mxu0 %v2223
        %2474 = vmatprep.subr.bf16.mxu0 %v2216
        %2475 = vmatpush1.bf16.msra.mxu0 %v2215
        %2476 = vmatprep.subr.bf16.mxu0 0
        %2477 = vmatpush2.bf16.msra.mxu0 0
        %2478 = vmatprep.subr.bf16.mxu0 0
        %2479 = vmatpush2.bf16.msra.mxu0 0
        %2480 = vmatprep.subr.bf16.mxu0 %v2440
        %2481 = vmatpush2.bf16.msra.mxu0 %v2437
        %2482 = vmatprep.subr.bf16.mxu0 %v2312
        %2483 = vmatpush2.bf16.msra.mxu0 %v2311
        %2484 = vmatprep.subr.bf16.mxu0 %v2304
        %2485 = vmatpush2.bf16.msra.mxu0 %v2303
        %2486 = vmatprep.subr.bf16.mxu0 %v2296
        %2487 = vmatpush2.bf16.msra.mxu0 %v2295
        %2488 = vmatprep.subr.bf16.mxu0 %v2288
        %2489 = vmatpush2.bf16.msra.mxu0 %v2287
        %2490 = vmatprep.subr.bf16.mxu0 %v2280
        %2491 = vmatpush2.bf16.msra.mxu0 %v2279
        %2492 = vmatprep.mubr.bf16.mxu0 %v2433
        %2493 = vmatmul.mubr.bf16.gmra.mxu0 %v1888
        %v2494 = vpop.f32.mrf.mxu0
        %v2495 = vadd.f32 %v1875, %v2494
        %v2496 = vpop.f32.mrf.mxu0
        %v2497 = vadd.f32 %v1875, %v2496
        %v2498 = vpop.f32.mrf.mxu0
        %v2499 = vadd.f32 %v1880, %v2498
        %v2500 = vpop.f32.mrf.mxu0
        %v2501 = vadd.f32 %v1880, %v2500
        %2502 = vdwg.mxu0
        %2503 = vmatprep.subr.bf16.mxu0 %v2274
        %2504 = vmatpush1.bf16.msra.mxu0 %v2273
        %2505 = vmatprep.subr.bf16.mxu0 %v2266
        %2506 = vmatpush1.bf16.msra.mxu0 %v2265
        %2507 = vmatprep.subr.bf16.mxu0 %v2258
        %2508 = vmatpush1.bf16.msra.mxu0 %v2257
        %2509 = vmatprep.subr.bf16.mxu0 %v2250
        %2510 = vmatpush1.bf16.msra.mxu0 %v2249
        %2511 = vmatprep.subr.bf16.mxu0 %v2242
        %2512 = vmatpush1.bf16.msra.mxu0 %v2241
        %2513 = vmatprep.subr.bf16.mxu0 %v2234
        %2514 = vmatpush1.bf16.msra.mxu0 %v2233
        %2515 = vmatprep.subr.bf16.mxu0 %v2226
        %2516 = vmatpush1.bf16.msra.mxu0 %v2225
        %2517 = vmatprep.subr.bf16.mxu0 %v2218
        %2518 = vmatpush1.bf16.msra.mxu0 %v2217
        %2519 = vmatprep.subr.bf16.mxu0 0
        %2520 = vmatpush2.bf16.msra.mxu0 0
        %2521 = vmatprep.subr.bf16.mxu0 0
        %2522 = vmatpush2.bf16.msra.mxu0 0
        %2523 = vmatprep.subr.bf16.mxu0 %v2446
        %2524 = vmatpush2.bf16.msra.mxu0 %v2443
        %2525 = vmatprep.subr.bf16.mxu0 %v2314
        %2526 = vmatpush2.bf16.msra.mxu0 %v2313
        %2527 = vmatprep.subr.bf16.mxu0 %v2306
        %2528 = vmatpush2.bf16.msra.mxu0 %v2305
        %2529 = vmatprep.subr.bf16.mxu0 %v2298
        %2530 = vmatpush2.bf16.msra.mxu0 %v2297
        %2531 = vmatprep.subr.bf16.mxu0 %v2290
        %2532 = vmatpush2.bf16.msra.mxu0 %v2289
        %2533 = vmatprep.subr.bf16.mxu0 %v2282
        %2534 = vmatpush2.bf16.msra.mxu0 %v2281
        %2535 = vmatprep.mubr.bf16.mxu0 %v2433
        %2536 = vmatmul.mubr.bf16.gmra.mxu0 %v1888
        %v2537 = vpop.f32.mrf.mxu0
        %v2538 = vadd.f32 %v1875, %v2537
        %v2539 = vpop.f32.mrf.mxu0
        %v2540 = vadd.f32 %v1875, %v2539
        %v2541 = vpop.f32.mrf.mxu0
        %v2542 = vadd.f32 %v1880, %v2541
        %v2543 = vpop.f32.mrf.mxu0
        %v2544 = vadd.f32 %v1880, %v2543
        %2545 = vdwg.mxu0
        %2546 = vmatprep.subr.bf16.mxu0 %v2276
        %2547 = vmatpush1.bf16.msra.mxu0 %v2275
        %2548 = vmatprep.subr.bf16.mxu0 %v2268
        %2549 = vmatpush1.bf16.msra.mxu0 %v2267
        %2550 = vmatprep.subr.bf16.mxu0 %v2260
        %2551 = vmatpush1.bf16.msra.mxu0 %v2259
        %2552 = vmatprep.subr.bf16.mxu0 %v2252
        %2553 = vmatpush1.bf16.msra.mxu0 %v2251
        %2554 = vmatprep.subr.bf16.mxu0 %v2244
        %2555 = vmatpush1.bf16.msra.mxu0 %v2243
        %2556 = vmatprep.subr.bf16.mxu0 %v2236
        %2557 = vmatpush1.bf16.msra.mxu0 %v2235
        %2558 = vmatprep.subr.bf16.mxu0 %v2228
        %2559 = vmatpush1.bf16.msra.mxu0 %v2227
        %2560 = vmatprep.subr.bf16.mxu0 %v2220
        %2561 = vmatpush1.bf16.msra.mxu0 %v2219
        %2562 = vmatprep.subr.bf16.mxu0 0
        %2563 = vmatpush2.bf16.msra.mxu0 0
        %2564 = vmatprep.subr.bf16.mxu0 0
        %2565 = vmatpush2.bf16.msra.mxu0 0
        %2566 = vmatprep.subr.bf16.mxu0 %v2452
        %2567 = vmatpush2.bf16.msra.mxu0 %v2449
        %2568 = vmatprep.subr.bf16.mxu0 %v2316
        %2569 = vmatpush2.bf16.msra.mxu0 %v2315
        %2570 = vmatprep.subr.bf16.mxu0 %v2308
        %2571 = vmatpush2.bf16.msra.mxu0 %v2307
        %2572 = vmatprep.subr.bf16.mxu0 %v2300
        %2573 = vmatpush2.bf16.msra.mxu0 %v2299
        %2574 = vmatprep.subr.bf16.mxu0 %v2292
        %2575 = vmatpush2.bf16.msra.mxu0 %v2291
        %2576 = vmatprep.subr.bf16.mxu0 %v2284
        %2577 = vmatpush2.bf16.msra.mxu0 %v2283
        %2578 = vmatprep.mubr.bf16.mxu0 %v2433
        %2579 = vmatmul.mubr.bf16.gmra.mxu0 %v1888
        %v2580 = vpop.f32.mrf.mxu0
        %v2581 = vadd.f32 %v1875, %v2580
        %v2582 = vpop.f32.mrf.mxu0
        %v2583 = vadd.f32 %v1875, %v2582
        %v2584 = vpop.f32.mrf.mxu0
        %v2585 = vadd.f32 %v1880, %v2584
        %v2586 = vpop.f32.mrf.mxu0
        %v2587 = vadd.f32 %v1880, %v2586
        %2588 = vdwg.mxu0
        %2589 = vmatprep.subr.bf16.mxu0 %v2278
        %2590 = vmatpush1.bf16.msra.mxu0 %v2277
        %2591 = vmatprep.subr.bf16.mxu0 %v2270
        %2592 = vmatpush1.bf16.msra.mxu0 %v2269
        %2593 = vmatprep.subr.bf16.mxu0 %v2262
        %2594 = vmatpush1.bf16.msra.mxu0 %v2261
        %2595 = vmatprep.subr.bf16.mxu0 %v2254
        %2596 = vmatpush1.bf16.msra.mxu0 %v2253
        %2597 = vmatprep.subr.bf16.mxu0 %v2246
        %2598 = vmatpush1.bf16.msra.mxu0 %v2245
        %2599 = vmatprep.subr.bf16.mxu0 %v2238
        %2600 = vmatpush1.bf16.msra.mxu0 %v2237
        %2601 = vmatprep.subr.bf16.mxu0 %v2230
        %2602 = vmatpush1.bf16.msra.mxu0 %v2229
        %2603 = vmatprep.subr.bf16.mxu0 %v2222
        %2604 = vmatpush1.bf16.msra.mxu0 %v2221
        %2605 = vmatprep.subr.bf16.mxu0 0
        %2606 = vmatpush2.bf16.msra.mxu0 0
        %2607 = vmatprep.subr.bf16.mxu0 0
        %2608 = vmatpush2.bf16.msra.mxu0 0
        %2609 = vmatprep.subr.bf16.mxu0 %v2458
        %2610 = vmatpush2.bf16.msra.mxu0 %v2455
        %2611 = vmatprep.subr.bf16.mxu0 %v2318
        %2612 = vmatpush2.bf16.msra.mxu0 %v2317
        %2613 = vmatprep.subr.bf16.mxu0 %v2310
        %2614 = vmatpush2.bf16.msra.mxu0 %v2309
        %2615 = vmatprep.subr.bf16.mxu0 %v2302
        %2616 = vmatpush2.bf16.msra.mxu0 %v2301
        %2617 = vmatprep.subr.bf16.mxu0 %v2294
        %2618 = vmatpush2.bf16.msra.mxu0 %v2293
        %2619 = vmatprep.subr.bf16.mxu0 %v2286
        %2620 = vmatpush2.bf16.msra.mxu0 %v2285
        %2621 = vmatprep.mubr.bf16.mxu0 %v2433
        %2622 = vmatmul.mubr.bf16.gmra.mxu0 %v1888
        %v2623 = vpop.f32.mrf.mxu0
        %v2624 = vadd.f32 %v1875, %v2623
        %v2625 = vpop.f32.mrf.mxu0
        %v2626 = vadd.f32 %v1875, %v2625
        %v2627 = vpop.f32.mrf.mxu0
        %v2628 = vadd.f32 %v1880, %v2627
        %v2629 = vpop.f32.mrf.mxu0
        %v2630 = vadd.f32 %v1880, %v2629
        %2631 = vdwg.mxu0
        %v2632 = vmul.f32 %v2495, 0.5
        %v2633 = vmul.f32 %v2497, 0.5
        %v2634 = vmul.f32 %v2538, 0.5
        %v2635 = vmul.f32 %v2540, 0.5
        %v2636 = vmul.f32 %v2581, 0.5
        %v2637 = vmul.f32 %v2583, 0.5
        %v2638 = vmul.f32 %v2624, 0.5
        %v2639 = vmul.f32 %v2626, 0.5
        %v2640 = vmul.f32 %v2499, 0.5
        %v2641 = vmul.f32 %v2501, 0.5
        %v2642 = vmul.f32 %v2542, 0.5
        %v2643 = vmul.f32 %v2544, 0.5
        %v2644 = vmul.f32 %v2585, 0.5
        %v2645 = vmul.f32 %v2587, 0.5
        %v2646 = vmul.f32 %v2628, 0.5
        %v2647 = vmul.f32 %v2630, 0.5
        %v2648 = vtanh.pop %v2632
        %v2649 = vtanh.pop %v2633
        %v2650 = vtanh.pop %v2634
        %v2651 = vtanh.pop %v2635
        %v2652 = vtanh.pop %v2636
        %v2653 = vtanh.pop %v2637
        %v2654 = vtanh.pop %v2638
        %v2655 = vtanh.pop %v2639
        %v2656 = vtanh.pop %v2640
        %v2657 = vtanh.pop %v2641
        %v2658 = vtanh.pop %v2642
        %v2659 = vtanh.pop %v2643
        %v2660 = vtanh.pop %v2644
        %v2661 = vtanh.pop %v2645
        %v2662 = vtanh.pop %v2646
        %v2663 = vtanh.pop %v2647
        %v2664 = vmul.f32 %v2648, 0.5
        %v2665 = vmul.f32 %v2649, 0.5
        %v2666 = vmul.f32 %v2650, 0.5
        %v2667 = vmul.f32 %v2651, 0.5
        %v2668 = vmul.f32 %v2652, 0.5
        %v2669 = vmul.f32 %v2653, 0.5
        %v2670 = vmul.f32 %v2654, 0.5
        %v2671 = vmul.f32 %v2655, 0.5
        %v2672 = vmul.f32 %v2656, 0.5
        %v2673 = vmul.f32 %v2657, 0.5
        %v2674 = vmul.f32 %v2658, 0.5
        %v2675 = vmul.f32 %v2659, 0.5
        %v2676 = vmul.f32 %v2660, 0.5
        %v2677 = vmul.f32 %v2661, 0.5
        %v2678 = vmul.f32 %v2662, 0.5
        %v2679 = vmul.f32 %v2663, 0.5
        %v2680 = vadd.f32 %v2664, 0.5
        %v2681 = vadd.f32 %v2665, 0.5
        %v2682 = vadd.f32 %v2666, 0.5
        %v2683 = vadd.f32 %v2667, 0.5
        %v2684 = vadd.f32 %v2668, 0.5
        %v2685 = vadd.f32 %v2669, 0.5
        %v2686 = vadd.f32 %v2670, 0.5
        %v2687 = vadd.f32 %v2671, 0.5
        %v2688 = vadd.f32 %v2672, 0.5
        %v2689 = vadd.f32 %v2673, 0.5
        %v2690 = vadd.f32 %v2674, 0.5
        %v2691 = vadd.f32 %v2675, 0.5
        %v2692 = vadd.f32 %v2676, 0.5
        %v2693 = vadd.f32 %v2677, 0.5
        %v2694 = vadd.f32 %v2678, 0.5
        %v2695 = vadd.f32 %v2679, 0.5
        %v2696 = vmul.f32 %v2495, %v2680
        %v2697 = vmul.f32 %v2497, %v2681
        %v2698 = vmul.f32 %v2538, %v2682
        %v2699 = vmul.f32 %v2540, %v2683
        %v2700 = vmul.f32 %v2581, %v2684
        %v2701 = vmul.f32 %v2583, %v2685
        %v2702 = vmul.f32 %v2624, %v2686
        %v2703 = vmul.f32 %v2626, %v2687
        %v2704 = vmul.f32 %v2499, %v2688
        %v2705 = vmul.f32 %v2501, %v2689
        %v2706 = vmul.f32 %v2542, %v2690
        %v2707 = vmul.f32 %v2544, %v2691
        %v2708 = vmul.f32 %v2585, %v2692
        %v2709 = vmul.f32 %v2587, %v2693
        %v2710 = vmul.f32 %v2628, %v2694
        %v2711 = vmul.f32 %v2630, %v2695
        %v2712 = vld [vmem:[%s5] sm:$0x7]
        %v2713 = vld [vmem:[%s6] sm:$0x7]
        %2715 = vset.pattern.permute.xlu0 0
        %2716 = vperm.xlu0 %2715, %v2713
        %v2717 = vpop.permute.xlu0 %2716
        %vm2719 = vcmask 72704
        %v2721 = vsel %vm2719, %v2712, 0
        %vm2723 = vcmask 1040384
        %v2725 = vsel %vm2723, %v2704, 0
        %v2728 = vsel %vm2723, %v2705, 0
        %v2731 = vsel %vm2723, %v2706, 0
        %v2734 = vsel %vm2723, %v2707, 0
        %v2737 = vsel %vm2723, %v2708, 0
        %v2740 = vsel %vm2723, %v2709, 0
        %v2743 = vsel %vm2723, %v2710, 0
        %v2746 = vsel %vm2723, %v2711, 0
        %2748 = vmatprep.subr.mxu0 0.0
        %2749 = vmatpush1.msra.mxu0 0.0
        %2750 = vmatprep.subr.mxu0 0.0
        %2751 = vmatpush1.msra.mxu0 0.0
        %2752 = vmatprep.subr.mxu0 0.0
        %2753 = vmatpush1.msra.mxu0 0.0
        %2754 = vmatprep.subr.mxu0 0.0
        %2755 = vmatpush1.msra.mxu0 0.0
        %2756 = vmatprep.subr.mxu0 0.0
        %2757 = vmatpush1.msra.mxu0 0.0
        %2758 = vmatprep.subr.mxu0 0.0
        %2759 = vmatpush1.msra.mxu0 0.0
        %2760 = vmatprep.subr.mxu0 0.0
        %2761 = vmatpush1.msra.mxu0 0.0
        %2762 = vmatprep.subr.mxu0 0.0
        %2763 = vmatpush1.msra.mxu0 0.0
        %2764 = vmatprep.subr.mxu0 0.0
        %2765 = vmatpush1.msra.mxu0 0.0
        %2766 = vmatprep.subr.mxu0 0.0
        %2767 = vmatpush1.msra.mxu0 0.0
        %2768 = vmatprep.subr.mxu0 0.0
        %2769 = vmatpush1.msra.mxu0 0.0
        %2770 = vmatprep.subr.mxu0 0.0
        %2771 = vmatpush1.msra.mxu0 0.0
        %2772 = vmatprep.subr.mxu0 0.0
        %2773 = vmatpush1.msra.mxu0 0.0
        %2774 = vmatprep.subr.mxu0 0.0
        %2775 = vmatpush1.msra.mxu0 0.0
        %2776 = vmatprep.subr.mxu0 %v2728
        %2777 = vmatpush1.msra.mxu0 %v2725
        %2778 = vmatprep.subr.mxu0 %v2697
        %2779 = vmatpush1.msra.mxu0 %v2696
        %2780 = vmatprep.subr.mxu0 0.0
        %2781 = vmatpush2.msra.mxu0 0.0
        %2782 = vmatprep.subr.mxu0 0.0
        %2783 = vmatpush2.msra.mxu0 0.0
        %2784 = vmatprep.subr.mxu0 0.0
        %2785 = vmatpush2.msra.mxu0 0.0
        %2786 = vmatprep.subr.mxu0 0.0
        %2787 = vmatpush2.msra.mxu0 0.0
        %2788 = vmatprep.subr.mxu0 0.0
        %2789 = vmatpush2.msra.mxu0 0.0
        %2790 = vmatprep.subr.mxu0 0.0
        %2791 = vmatpush2.msra.mxu0 0.0
        %2792 = vmatprep.subr.mxu0 0.0
        %2793 = vmatpush2.msra.mxu0 0.0
        %2794 = vmatprep.subr.mxu0 0.0
        %2795 = vmatpush2.msra.mxu0 0.0
        %2796 = vmatprep.subr.mxu0 0.0
        %2797 = vmatpush2.msra.mxu0 0.0
        %2798 = vmatprep.subr.mxu0 0.0
        %2799 = vmatpush2.msra.mxu0 0.0
        %2800 = vmatprep.subr.mxu0 0.0
        %2801 = vmatpush2.msra.mxu0 0.0
        %2802 = vmatprep.subr.mxu0 0.0
        %2803 = vmatpush2.msra.mxu0 0.0
        %2804 = vmatprep.subr.mxu0 0.0
        %2805 = vmatpush2.msra.mxu0 0.0
        %2806 = vmatprep.subr.mxu0 0.0
        %2807 = vmatpush2.msra.mxu0 0.0
        %2808 = vmatprep.subr.mxu0 0.0
        %2809 = vmatpush2.msra.mxu0 0.0
        %2810 = vmatprep.subr.mxu0 0.0
        %2811 = vmatpush2.msra.mxu0 0.0
        %2812 = vmatprep.mubr.f32.mxu0 0.0
        %2813 = vmatmul.mubr.f32.gmra.mxu0 %v2721
        %v2814 = vpop.f32.mrf.mxu0
        %v2815 = vadd.f32 %v2717, %v2814
        %v2816 = vpop.f32.mrf.mxu0
        %v2817 = vadd.f32 %v2717, %v2816
        %2818 = vdwg.mxu0
        %2819 = vmatprep.subr.mxu0 0.0
        %2820 = vmatpush1.msra.mxu0 0.0
        %2821 = vmatprep.subr.mxu0 0.0
        %2822 = vmatpush1.msra.mxu0 0.0
        %2823 = vmatprep.subr.mxu0 0.0
        %2824 = vmatpush1.msra.mxu0 0.0
        %2825 = vmatprep.subr.mxu0 0.0
        %2826 = vmatpush1.msra.mxu0 0.0
        %2827 = vmatprep.subr.mxu0 0.0
        %2828 = vmatpush1.msra.mxu0 0.0
        %2829 = vmatprep.subr.mxu0 0.0
        %2830 = vmatpush1.msra.mxu0 0.0
        %2831 = vmatprep.subr.mxu0 0.0
        %2832 = vmatpush1.msra.mxu0 0.0
        %2833 = vmatprep.subr.mxu0 0.0
        %2834 = vmatpush1.msra.mxu0 0.0
        %2835 = vmatprep.subr.mxu0 0.0
        %2836 = vmatpush1.msra.mxu0 0.0
        %2837 = vmatprep.subr.mxu0 0.0
        %2838 = vmatpush1.msra.mxu0 0.0
        %2839 = vmatprep.subr.mxu0 0.0
        %2840 = vmatpush1.msra.mxu0 0.0
        %2841 = vmatprep.subr.mxu0 0.0
        %2842 = vmatpush1.msra.mxu0 0.0
        %2843 = vmatprep.subr.mxu0 0.0
        %2844 = vmatpush1.msra.mxu0 0.0
        %2845 = vmatprep.subr.mxu0 0.0
        %2846 = vmatpush1.msra.mxu0 0.0
        %2847 = vmatprep.subr.mxu0 %v2734
        %2848 = vmatpush1.msra.mxu0 %v2731
        %2849 = vmatprep.subr.mxu0 %v2699
        %2850 = vmatpush1.msra.mxu0 %v2698
        %2851 = vmatprep.subr.mxu0 0.0
        %2852 = vmatpush2.msra.mxu0 0.0
        %2853 = vmatprep.subr.mxu0 0.0
        %2854 = vmatpush2.msra.mxu0 0.0
        %2855 = vmatprep.subr.mxu0 0.0
        %2856 = vmatpush2.msra.mxu0 0.0
        %2857 = vmatprep.subr.mxu0 0.0
        %2858 = vmatpush2.msra.mxu0 0.0
        %2859 = vmatprep.subr.mxu0 0.0
        %2860 = vmatpush2.msra.mxu0 0.0
        %2861 = vmatprep.subr.mxu0 0.0
        %2862 = vmatpush2.msra.mxu0 0.0
        %2863 = vmatprep.subr.mxu0 0.0
        %2864 = vmatpush2.msra.mxu0 0.0
        %2865 = vmatprep.subr.mxu0 0.0
        %2866 = vmatpush2.msra.mxu0 0.0
        %2867 = vmatprep.subr.mxu0 0.0
        %2868 = vmatpush2.msra.mxu0 0.0
        %2869 = vmatprep.subr.mxu0 0.0
        %2870 = vmatpush2.msra.mxu0 0.0
        %2871 = vmatprep.subr.mxu0 0.0
        %2872 = vmatpush2.msra.mxu0 0.0
        %2873 = vmatprep.subr.mxu0 0.0
        %2874 = vmatpush2.msra.mxu0 0.0
        %2875 = vmatprep.subr.mxu0 0.0
        %2876 = vmatpush2.msra.mxu0 0.0
        %2877 = vmatprep.subr.mxu0 0.0
        %2878 = vmatpush2.msra.mxu0 0.0
        %2879 = vmatprep.subr.mxu0 0.0
        %2880 = vmatpush2.msra.mxu0 0.0
        %2881 = vmatprep.subr.mxu0 0.0
        %2882 = vmatpush2.msra.mxu0 0.0
        %2883 = vmatprep.mubr.f32.mxu0 0.0
        %2884 = vmatmul.mubr.f32.gmra.mxu0 %v2721
        %v2885 = vpop.f32.mrf.mxu0
        %v2886 = vadd.f32 %v2717, %v2885
        %v2887 = vpop.f32.mrf.mxu0
        %v2888 = vadd.f32 %v2717, %v2887
        %2889 = vdwg.mxu0
        %2890 = vmatprep.subr.mxu0 0.0
        %2891 = vmatpush1.msra.mxu0 0.0
        %2892 = vmatprep.subr.mxu0 0.0
        %2893 = vmatpush1.msra.mxu0 0.0
        %2894 = vmatprep.subr.mxu0 0.0
        %2895 = vmatpush1.msra.mxu0 0.0
        %2896 = vmatprep.subr.mxu0 0.0
        %2897 = vmatpush1.msra.mxu0 0.0
        %2898 = vmatprep.subr.mxu0 0.0
        %2899 = vmatpush1.msra.mxu0 0.0
        %2900 = vmatprep.subr.mxu0 0.0
        %2901 = vmatpush1.msra.mxu0 0.0
        %2902 = vmatprep.subr.mxu0 0.0
        %2903 = vmatpush1.msra.mxu0 0.0
        %2904 = vmatprep.subr.mxu0 0.0
        %2905 = vmatpush1.msra.mxu0 0.0
        %2906 = vmatprep.subr.mxu0 0.0
        %2907 = vmatpush1.msra.mxu0 0.0
        %2908 = vmatprep.subr.mxu0 0.0
        %2909 = vmatpush1.msra.mxu0 0.0
        %2910 = vmatprep.subr.mxu0 0.0
        %2911 = vmatpush1.msra.mxu0 0.0
        %2912 = vmatprep.subr.mxu0 0.0
        %2913 = vmatpush1.msra.mxu0 0.0
        %2914 = vmatprep.subr.mxu0 0.0
        %2915 = vmatpush1.msra.mxu0 0.0
        %2916 = vmatprep.subr.mxu0 0.0
        %2917 = vmatpush1.msra.mxu0 0.0
        %2918 = vmatprep.subr.mxu0 %v2740
        %2919 = vmatpush1.msra.mxu0 %v2737
        %2920 = vmatprep.subr.mxu0 %v2701
        %2921 = vmatpush1.msra.mxu0 %v2700
        %2922 = vmatprep.subr.mxu0 0.0
        %2923 = vmatpush2.msra.mxu0 0.0
        %2924 = vmatprep.subr.mxu0 0.0
        %2925 = vmatpush2.msra.mxu0 0.0
        %2926 = vmatprep.subr.mxu0 0.0
        %2927 = vmatpush2.msra.mxu0 0.0
        %2928 = vmatprep.subr.mxu0 0.0
        %2929 = vmatpush2.msra.mxu0 0.0
        %2930 = vmatprep.subr.mxu0 0.0
        %2931 = vmatpush2.msra.mxu0 0.0
        %2932 = vmatprep.subr.mxu0 0.0
        %2933 = vmatpush2.msra.mxu0 0.0
        %2934 = vmatprep.subr.mxu0 0.0
        %2935 = vmatpush2.msra.mxu0 0.0
        %2936 = vmatprep.subr.mxu0 0.0
        %2937 = vmatpush2.msra.mxu0 0.0
        %2938 = vmatprep.subr.mxu0 0.0
        %2939 = vmatpush2.msra.mxu0 0.0
        %2940 = vmatprep.subr.mxu0 0.0
        %2941 = vmatpush2.msra.mxu0 0.0
        %2942 = vmatprep.subr.mxu0 0.0
        %2943 = vmatpush2.msra.mxu0 0.0
        %2944 = vmatprep.subr.mxu0 0.0
        %2945 = vmatpush2.msra.mxu0 0.0
        %2946 = vmatprep.subr.mxu0 0.0
        %2947 = vmatpush2.msra.mxu0 0.0
        %2948 = vmatprep.subr.mxu0 0.0
        %2949 = vmatpush2.msra.mxu0 0.0
        %2950 = vmatprep.subr.mxu0 0.0
        %2951 = vmatpush2.msra.mxu0 0.0
        %2952 = vmatprep.subr.mxu0 0.0
        %2953 = vmatpush2.msra.mxu0 0.0
        %2954 = vmatprep.mubr.f32.mxu0 0.0
        %2955 = vmatmul.mubr.f32.gmra.mxu0 %v2721
        %v2956 = vpop.f32.mrf.mxu0
        %v2957 = vadd.f32 %v2717, %v2956
        %v2958 = vpop.f32.mrf.mxu0
        %v2959 = vadd.f32 %v2717, %v2958
        %2960 = vdwg.mxu0
        %2961 = vmatprep.subr.mxu0 0.0
        %2962 = vmatpush1.msra.mxu0 0.0
        %2963 = vmatprep.subr.mxu0 0.0
        %2964 = vmatpush1.msra.mxu0 0.0
        %2965 = vmatprep.subr.mxu0 0.0
        %2966 = vmatpush1.msra.mxu0 0.0
        %2967 = vmatprep.subr.mxu0 0.0
        %2968 = vmatpush1.msra.mxu0 0.0
        %2969 = vmatprep.subr.mxu0 0.0
        %2970 = vmatpush1.msra.mxu0 0.0
        %2971 = vmatprep.subr.mxu0 0.0
        %2972 = vmatpush1.msra.mxu0 0.0
        %2973 = vmatprep.subr.mxu0 0.0
        %2974 = vmatpush1.msra.mxu0 0.0
        %2975 = vmatprep.subr.mxu0 0.0
        %2976 = vmatpush1.msra.mxu0 0.0
        %2977 = vmatprep.subr.mxu0 0.0
        %2978 = vmatpush1.msra.mxu0 0.0
        %2979 = vmatprep.subr.mxu0 0.0
        %2980 = vmatpush1.msra.mxu0 0.0
        %2981 = vmatprep.subr.mxu0 0.0
        %2982 = vmatpush1.msra.mxu0 0.0
        %2983 = vmatprep.subr.mxu0 0.0
        %2984 = vmatpush1.msra.mxu0 0.0
        %2985 = vmatprep.subr.mxu0 0.0
        %2986 = vmatpush1.msra.mxu0 0.0
        %2987 = vmatprep.subr.mxu0 0.0
        %2988 = vmatpush1.msra.mxu0 0.0
        %2989 = vmatprep.subr.mxu0 %v2746
        %2990 = vmatpush1.msra.mxu0 %v2743
        %2991 = vmatprep.subr.mxu0 %v2703
        %2992 = vmatpush1.msra.mxu0 %v2702
        %2993 = vmatprep.subr.mxu0 0.0
        %2994 = vmatpush2.msra.mxu0 0.0
        %2995 = vmatprep.subr.mxu0 0.0
        %2996 = vmatpush2.msra.mxu0 0.0
        %2997 = vmatprep.subr.mxu0 0.0
        %2998 = vmatpush2.msra.mxu0 0.0
        %2999 = vmatprep.subr.mxu0 0.0
        %3000 = vmatpush2.msra.mxu0 0.0
        %3001 = vmatprep.subr.mxu0 0.0
        %3002 = vmatpush2.msra.mxu0 0.0
        %3003 = vmatprep.subr.mxu0 0.0
        %3004 = vmatpush2.msra.mxu0 0.0
        %3005 = vmatprep.subr.mxu0 0.0
        %3006 = vmatpush2.msra.mxu0 0.0
        %3007 = vmatprep.subr.mxu0 0.0
        %3008 = vmatpush2.msra.mxu0 0.0
        %3009 = vmatprep.subr.mxu0 0.0
        %3010 = vmatpush2.msra.mxu0 0.0
        %3011 = vmatprep.subr.mxu0 0.0
        %3012 = vmatpush2.msra.mxu0 0.0
        %3013 = vmatprep.subr.mxu0 0.0
        %3014 = vmatpush2.msra.mxu0 0.0
        %3015 = vmatprep.subr.mxu0 0.0
        %3016 = vmatpush2.msra.mxu0 0.0
        %3017 = vmatprep.subr.mxu0 0.0
        %3018 = vmatpush2.msra.mxu0 0.0
        %3019 = vmatprep.subr.mxu0 0.0
        %3020 = vmatpush2.msra.mxu0 0.0
        %3021 = vmatprep.subr.mxu0 0.0
        %3022 = vmatpush2.msra.mxu0 0.0
        %3023 = vmatprep.subr.mxu0 0.0
        %3024 = vmatpush2.msra.mxu0 0.0
        %3025 = vmatprep.mubr.f32.mxu0 0.0
        %3026 = vmatmul.mubr.f32.gmra.mxu0 %v2721
        %v3027 = vpop.f32.mrf.mxu0
        %v3028 = vadd.f32 %v2717, %v3027
        %v3029 = vpop.f32.mrf.mxu0
        %v3030 = vadd.f32 %v2717, %v3029
        %3031 = vdwg.mxu0
        %v3032 = vmul.f32 %v2815, 0.5
        %v3033 = vmul.f32 %v2817, 0.5
        %v3034 = vmul.f32 %v2886, 0.5
        %v3035 = vmul.f32 %v2888, 0.5
        %v3036 = vmul.f32 %v2957, 0.5
        %v3037 = vmul.f32 %v2959, 0.5
        %v3038 = vmul.f32 %v3028, 0.5
        %v3039 = vmul.f32 %v3030, 0.5
        %v3040 = vtanh.pop %v3032
        %v3041 = vtanh.pop %v3033
        %v3042 = vtanh.pop %v3034
        %v3043 = vtanh.pop %v3035
        %v3044 = vtanh.pop %v3036
        %v3045 = vtanh.pop %v3037
        %v3046 = vtanh.pop %v3038
        %v3047 = vtanh.pop %v3039
        %v3048 = vmul.f32 %v3040, 0.5
        %v3049 = vmul.f32 %v3041, 0.5
        %v3050 = vmul.f32 %v3042, 0.5
        %v3051 = vmul.f32 %v3043, 0.5
        %v3052 = vmul.f32 %v3044, 0.5
        %v3053 = vmul.f32 %v3045, 0.5
        %v3054 = vmul.f32 %v3046, 0.5
        %v3055 = vmul.f32 %v3047, 0.5
        %v3056 = vadd.f32 %v3048, 0.5
        %v3057 = vadd.f32 %v3049, 0.5
        %v3058 = vadd.f32 %v3050, 0.5
        %v3059 = vadd.f32 %v3051, 0.5
        %v3060 = vadd.f32 %v3052, 0.5
        %v3061 = vadd.f32 %v3053, 0.5
        %v3062 = vadd.f32 %v3054, 0.5
        %v3063 = vadd.f32 %v3055, 0.5
        %v3064 = vmul.f32 %v2815, %v3056
        %v3065 = vmul.f32 %v2817, %v3057
        %v3066 = vmul.f32 %v2886, %v3058
        %v3067 = vmul.f32 %v2888, %v3059
        %v3068 = vmul.f32 %v2957, %v3060
        %v3069 = vmul.f32 %v2959, %v3061
        %v3070 = vmul.f32 %v3028, %v3062
        %v3071 = vmul.f32 %v3030, %v3063
        %v3080 = vcombine.low %v3064, %v3065
        %v3081 = vcombine.low %v3066, %v3067
        %v3082 = vcombine.low %v3068, %v3069
        %v3083 = vcombine.low %v3070, %v3071
        %3088 = vst [vmem:[%s270] sm:$0x77] %v3080
        %3089 = vst [vmem:[%s270 + $0x8] sm:$0x77] %v3081
        %3090 = vst [vmem:[%s270 + $0x10] sm:$0x77] %v3082
        %3091 = vst [vmem:[%s270 + $0x18] sm:$0x77] %v3083
        %s3092 = sand.u32 %s181, 1
        %s3093 = scalar_lea.sflag [#allocation3], %s3092
        %s3094 = sand.u32 %s181, 1
        %s3095 = smul.addr %s3094, 32
        %s3096 = scalar_lea.vmem [#allocation2], %s3095
        // Predicated region
        $region49: #{tpu_custom_call.1} parent=47 // pred_check
          %p3097 = pneg %p191
        $region50: #{tpu_custom_call.1} parent=47 // pred_check_branch
          %3099 = sbr.rel (%p3097) target = $region52
        $region51: #{tpu_custom_call.1} parent=47 // pred_region
          %s3100 = smul.u32 8, %s21
          %s3102 = ssub.s32 512, 512
          %3103 = vsyncadd %s3093, %s3102
          %s3104 = smul.addr %s3100, 64
          %s3105 = scalar_lea.hbm %s7, %s3104
          %s3107 = sshll.u32 %s3096, 4
          %s3108 = int_to_ptr.vmem [resolvable:$true] %s3107
          %3110 = dma.vmem_to_hbm [thread:$0]  %s3108, 512, %s3105, %s3093
        $region52: #{tpu_custom_call.1} parent=47 // pred_fallthru
          _
      $region48: #{tpu_custom_call.1} parent=5 // pred_fallthru
        _
      %p3111 = scmp.le.s32.totalorder 2, %s16
      // Predicated region
      $region53: #{tpu_custom_call.1} parent=5 // pred_check
        %p3112 = pneg %p3111
      $region54: #{tpu_custom_call.1} parent=5 // pred_check_branch
        %3114 = sbr.rel (%p3112) target = $region56
      $region55: #{tpu_custom_call.1} parent=5 // pred_region
        %s3115 = ssub.s32 %s16, 2
        // Predicated region
        $region57: #{tpu_custom_call.1} parent=55 // pred_check
          %p3116 = pneg %p197
        $region58: #{tpu_custom_call.1} parent=55 // pred_check_branch
          %3118 = sbr.rel (%p3116) target = $region60
        $region59: #{tpu_custom_call.1} parent=55 // pred_region
          %s3119 = sand.u32 %s182, 1
          %s3120 = scalar_lea.sflag [#allocation3], %s3119
          %s3121 = sand.u32 %s182, 1
          %s3122 = smul.addr %s3121, 32
          %s3123 = scalar_lea.vmem [#allocation2], %s3122
          %3124 = dma.done %s3120, 512
        $region60: #{tpu_custom_call.1} parent=55 // pred_fallthru
          _
      $region56: #{tpu_custom_call.1} parent=5 // pred_fallthru
        _
    $region6: #{tpu_custom_call.1} parent=1 // loop_footer
      %s20 = sadd.s32 1, %s16
    $region7: #{tpu_custom_call.1} parent=1 // loop_footer_branch
      %15 = sbr.rel target = $region3
    $region8: #{tpu_custom_call.1} parent=1 // loop_exit
      _
    %3125 = vsyncpa [#allocation3], 1
    %s3126 = scalar_lea.sflag [#allocation3], 1
    %3127 = vsyncpa %s3126, 1

</llo_original>
